<compile_context>
chip_gen: v5e
topology: v5e:2x2
jax: 0.10.0
libtpu: 0.0.40
codegen_flags: <defaults>
</compile_context>

<pallas_src>
import functools

import jax
import jax.numpy as jnp
from jax.experimental import pallas as pl
from jax.experimental.pallas import tpu as pltpu

EPS = 1e-5


def bn_conv1x1_kernel(x_ref, gamma_ref, beta_ref, w_ref, o_ref, *, inv_n):
    # x_ref:     (C_in, S)            f32
    # gamma_ref: (C_in, 1)            f32
    # beta_ref:  (C_in, 1)            f32
    # w_ref:     (C_out_tile, C_in)   bf16
    # o_ref:     (C_out_tile, S)      f32
    x = x_ref[...]

    # BatchNorm2d training-mode stats (two-pass, numerically safe).
    mean = jnp.sum(x, axis=1, keepdims=True) * inv_n            # (C_in, 1)
    xc = x - mean                                               # centered
    var = jnp.sum(xc * xc, axis=1, keepdims=True) * inv_n       # biased var
    inv_std = jax.lax.rsqrt(var + EPS)

    # Fused affine: xn = xc * (gamma * inv_std) + beta  (one FMA per element).
    scale = gamma_ref[...] * inv_std                            # (C_in, 1)
    xn = (xc * scale + beta_ref[...]).astype(jnp.bfloat16)      # (C_in, S)

    # 1x1 conv, stride 1, no bias == channel matmul on the MXU (bf16 in, f32 acc).
    o_ref[...] = jnp.dot(w_ref[...], xn, preferred_element_type=jnp.float32)


@functools.partial(jax.jit, static_argnames=("n_co", "core_parallel"))
def bn_conv1x1(x_nchw, gamma, beta, w2d_bf16, *, n_co=1, core_parallel=False):
    """x_nchw: (N, C_in, H, W); gamma/beta: (C_in,); w2d_bf16: (C_out, C_in) bf16."""
    N, C, H, W = x_nchw.shape
    Cout = w2d_bf16.shape[0]
    S = N * H * W

    # NCHW -> (C_in, S). For N == 1 this is a pure reshape (no copy).
    if N == 1:
        x_cs = x_nchw.reshape(C, S).astype(jnp.float32)
    else:
        x_cs = jnp.transpose(x_nchw, (1, 0, 2, 3)).reshape(C, S).astype(jnp.float32)
    g2d = gamma.reshape(C, 1).astype(jnp.float32)
    b2d = beta.reshape(C, 1).astype(jnp.float32)

    co_tile = Cout // n_co
    kernel = functools.partial(bn_conv1x1_kernel, inv_n=1.0 / float(S))

    if core_parallel:
        dim_sem = (pltpu.CORE_PARALLEL,)
    else:
        dim_sem = ("arbitrary",)

    cost = pl.CostEstimate(
        flops=2 * Cout * C * S,
        transcendentals=C,
        bytes_accessed=(C * S * 4) + (Cout * C * 2) + (2 * C * 4) + (Cout * S * 4),
    )

    out_cs = pl.pallas_call(
        kernel,
        out_shape=jax.ShapeDtypeStruct((Cout, S), jnp.float32),
        grid_spec=pltpu.PrefetchScalarGridSpec(
            num_scalar_prefetch=0,
            grid=(n_co,),
            in_specs=[
                pl.BlockSpec((C, S), lambda i: (0, 0)),
                pl.BlockSpec((C, 1), lambda i: (0, 0)),
                pl.BlockSpec((C, 1), lambda i: (0, 0)),
                pl.BlockSpec((co_tile, C), lambda i: (i, 0)),
            ],
            out_specs=pl.BlockSpec((co_tile, S), lambda i: (i, 0)),
        ),
        compiler_params=pltpu.CompilerParams(dimension_semantics=dim_sem),
        cost_estimate=cost,
    )(x_cs, g2d, b2d, w2d_bf16)

    # (C_out, S) -> NCHW
    if N == 1:
        return out_cs.reshape(1, Cout, H, W)
    return jnp.transpose(out_cs.reshape(Cout, N, H, W), (1, 0, 2, 3))


def _select_grid(Cout):
    """Split C_out only when a second TensorCore actually exists (v7x)."""
    try:
        kind = jax.devices()[0].device_kind.lower()
    except Exception:
        kind = ""
    if "v7" in kind and Cout % 2 == 0 and (Cout // 2) % 8 == 0:
        return 2, True
    return 1, False


def reference(x_nchw, gamma, beta, weight):
    x = x_nchw.astype(jnp.float32)
    mean = jnp.mean(x, axis=(0, 2, 3), keepdims=True)
    var = jnp.mean((x - mean) ** 2, axis=(0, 2, 3), keepdims=True)
    xn = (x - mean) / jnp.sqrt(var + EPS)
    xn = xn * gamma.reshape(1, -1, 1, 1) + beta.reshape(1, -1, 1, 1)
    w2d = weight.reshape(weight.shape[0], weight.shape[1])
    return jnp.einsum("oc,nchw->nohw", w2d, xn)


if __name__ == "__main__":
    # Shapes implied by the module: x (1, 136, 14, 14), BN(136), Conv 136->816 1x1.
    N, C_IN, H, W = 1, 136, 14, 14
    C_OUT = 816

    key = jax.random.PRNGKey(0)
    kx, kg, kb, kw = jax.random.split(key, 4)
    x = jax.random.normal(kx, (N, C_IN, H, W), dtype=jnp.float32)
    gamma = 1.0 + 0.1 * jax.random.normal(kg, (C_IN,), dtype=jnp.float32)
    beta = 0.1 * jax.random.normal(kb, (C_IN,), dtype=jnp.float32)
    weight = 0.05 * jax.random.normal(kw, (C_OUT, C_IN, 1, 1), dtype=jnp.float32)

    # "Model init": weight reshape + bf16 cast done once, outside the per-call path.
    w2d_bf16 = jax.block_until_ready(
        weight.reshape(C_OUT, C_IN).astype(jnp.bfloat16)
    )

    n_co, core_par = _select_grid(C_OUT)
    try:
        out = bn_conv1x1(x, gamma, beta, w2d_bf16, n_co=n_co, core_parallel=core_par)
        out = jax.block_until_ready(out)
    except Exception:
        # Fallback: single-tile grid (always legal on every TPU generation).
        out = bn_conv1x1(x, gamma, beta, w2d_bf16, n_co=1, core_parallel=False)
        out = jax.block_until_ready(out)

    ref = reference(x, gamma, beta, weight)
    assert out.shape == (N, C_OUT, H, W), out.shape
    assert jnp.allclose(out, ref, rtol=1e-2, atol=1e-2), "mismatch vs reference"

    print("KERNEL_OK")
</pallas_src>

<mosaic_0001>
module attributes {stable_mosaic.version = 11 : i64} {
  func.func @bn_conv1x1_kernel(%arg0: i32, %arg1: memref<136x196xf32, #tpu.memory_space<vmem>>, %arg2: memref<136x1xf32, #tpu.memory_space<vmem>>, %arg3: memref<136x1xf32, #tpu.memory_space<vmem>>, %arg4: memref<816x136xbf16, #tpu.memory_space<vmem>>, %arg5: memref<816x196xf32, #tpu.memory_space<vmem>>) attributes {dimension_semantics = [#tpu.dimension_semantics<arbitrary>], iteration_bounds = array<i64: 1>, scalar_prefetch = 0 : i64, scratch_operands = 0 : i64, tpu.core_type = #tpu.core_type<tc>, window_params = [{pipeline_mode = #tpu.pipeline_mode<synchronous>, transform_indices = @transform_0, window_bounds = array<i64: 136, 196>}, {pipeline_mode = #tpu.pipeline_mode<synchronous>, transform_indices = @transform_1, window_bounds = array<i64: 136, 1>}, {pipeline_mode = #tpu.pipeline_mode<synchronous>, transform_indices = @transform_2, window_bounds = array<i64: 136, 1>}, {transform_indices = @transform_3, window_bounds = array<i64: 816, 136>}, {transform_indices = @transform_4, window_bounds = array<i64: 816, 196>}]} {
    %c0 = arith.constant 0 : index
    %c0_0 = arith.constant 0 : index
    %0 = vector.load %arg1[%c0, %c0_0] : memref<136x196xf32, #tpu.memory_space<vmem>>, vector<136x196xf32>
    %cst = arith.constant dense<0.000000e+00> : vector<136xf32>
    %1 = vector.multi_reduction <add>, %0, %cst [1] : vector<136x196xf32> to vector<136xf32>
    %2 = vector.shape_cast %1 : vector<136xf32> to vector<136x1xf32>
    %cst_1 = arith.constant 0.00510204071 : f32
    %3 = vector.broadcast %cst_1 : f32 to vector<136x1xf32>
    %4 = arith.mulf %2, %3 : vector<136x1xf32>
    %5 = vector.broadcast %4 : vector<136x1xf32> to vector<136x196xf32>
    %6 = arith.subf %0, %5 : vector<136x196xf32>
    %7 = arith.mulf %6, %6 : vector<136x196xf32>
    %cst_2 = arith.constant dense<0.000000e+00> : vector<136xf32>
    %8 = vector.multi_reduction <add>, %7, %cst_2 [1] : vector<136x196xf32> to vector<136xf32>
    %9 = vector.shape_cast %8 : vector<136xf32> to vector<136x1xf32>
    %cst_3 = arith.constant 0.00510204071 : f32
    %10 = vector.broadcast %cst_3 : f32 to vector<136x1xf32>
    %11 = arith.mulf %9, %10 : vector<136x1xf32>
    %cst_4 = arith.constant 9.99999974E-6 : f32
    %12 = vector.broadcast %cst_4 : f32 to vector<136x1xf32>
    %13 = arith.addf %11, %12 : vector<136x1xf32>
    %14 = math.rsqrt %13 : vector<136x1xf32>
    %c0_5 = arith.constant 0 : index
    %c0_6 = arith.constant 0 : index
    %15 = vector.load %arg2[%c0_5, %c0_6] : memref<136x1xf32, #tpu.memory_space<vmem>>, vector<136x1xf32>
    %16 = arith.mulf %15, %14 : vector<136x1xf32>
    %17 = vector.broadcast %16 : vector<136x1xf32> to vector<136x196xf32>
    %18 = arith.mulf %6, %17 : vector<136x196xf32>
    %c0_7 = arith.constant 0 : index
    %c0_8 = arith.constant 0 : index
    %19 = vector.load %arg3[%c0_7, %c0_8] : memref<136x1xf32, #tpu.memory_space<vmem>>, vector<136x1xf32>
    %20 = vector.broadcast %19 : vector<136x1xf32> to vector<136x196xf32>
    %21 = arith.addf %18, %20 : vector<136x196xf32>
    %22 = arith.truncf %21 : vector<136x196xf32> to vector<136x196xbf16>
    %c0_9 = arith.constant 0 : index
    %c0_10 = arith.constant 0 : index
    %23 = vector.load %arg4[%c0_9, %c0_10] : memref<816x136xbf16, #tpu.memory_space<vmem>>, vector<816x136xbf16>
    %cst_11 = arith.constant dense<0.000000e+00> : vector<816x196xf32>
    %24 = tpu.matmul %23, %22, %cst_11 {dimension_numbers = #tpu.dot_dimension_numbers<[1], [0], [0], [1], [0, 0, 1, 1], [], []>} : vector<816x136xbf16>, vector<136x196xbf16>, vector<816x196xf32> -> vector<816x196xf32>
    %c0_12 = arith.constant 0 : index
    %c0_13 = arith.constant 0 : index
    %25 = vector.load %arg5[%c0_12, %c0_13] : memref<816x196xf32, #tpu.memory_space<vmem>>, vector<816x196xf32>
    tpu.vector_store %arg5[%c0_12, %c0_13], %24 {strides = array<i32>} : memref<816x196xf32, #tpu.memory_space<vmem>>, vector<816x196xf32>,
    return
  }
  func.func @transform_0(%arg0: i32) -> (i32, i32) {
    %c0_i32 = arith.constant 0 : i32
    %c0_i32_0 = arith.constant 0 : i32
    %c0_i32_1 = arith.constant 0 : i32
    return %c0_i32, %c0_i32_0 : i32, i32
  }
  func.func @transform_1(%arg0: i32) -> (i32, i32) {
    %c0_i32 = arith.constant 0 : i32
    %c0_i32_0 = arith.constant 0 : i32
    %c0_i32_1 = arith.constant 0 : i32
    return %c0_i32, %c0_i32_0 : i32, i32
  }
  func.func @transform_2(%arg0: i32) -> (i32, i32) {
    %c0_i32 = arith.constant 0 : i32
    %c0_i32_0 = arith.constant 0 : i32
    %c0_i32_1 = arith.constant 0 : i32
    return %c0_i32, %c0_i32_0 : i32, i32
  }
  func.func @transform_3(%arg0: i32) -> (i32, i32) {
    %c0_i32 = arith.constant 0 : i32
    %c0_i32_0 = arith.constant 0 : i32
    return %arg0, %c0_i32 : i32, i32
  }
  func.func @transform_4(%arg0: i32) -> (i32, i32) {
    %c0_i32 = arith.constant 0 : i32
    %c0_i32_0 = arith.constant 0 : i32
    return %arg0, %c0_i32 : i32, i32
  }
}

</mosaic_0001>

<llo_original>
// kernel: bn_conv1x1.1
$region0: #{bn_conv1x1.1}
  #allocation0 [shape = 'u32[]', space=smem, size = 0x4, offset = 0x4, fixed_abs, tag = 'smem constant byte address 0x4 - core index']
  #allocation1 [shape = 'u32[72,128]{1,0:T(1,128)}', space=vmem, size = 0x9000, scoped, tag = 'internal scratch']
  %s0 = inlined_call_operand.vmem [shape: f32[136,196], index: 0, kind: input, shape index: {}]
  %s1 = inlined_call_operand.vmem [shape: f32[136,1], index: 1, kind: input, shape index: {}]
  %s2 = inlined_call_operand.vmem [shape: f32[136,1], index: 2, kind: input, shape index: {}]
  %s3 = inlined_call_operand.vmem [shape: bf16[816,136], index: 3, kind: input, shape index: {}]
  %s4 = inlined_call_operand.vmem [shape: f32[816,196], index: 4, kind: output, shape index: {}]
  %s5 = sld [smem:[#allocation0]]
  $region26: #{bn_conv1x1.1} parent=0
    _
  %s7 = ssub.s32 1, %s5
  %s8 = scalar_select 0, %s7, %s5
  // Predicated region
  $region2: #{bn_conv1x1.1} parent=0 // pred_check
    _
  $region3: #{bn_conv1x1.1} parent=0 // pred_check_branch
    %10 = sbr.rel (0) target = $region5
  $region4: #{bn_conv1x1.1} parent=0 // pred_region
    _
  $region5: #{bn_conv1x1.1} parent=0 // pred_fallthru
    _
  // Predicated region
  $region6: #{bn_conv1x1.1} parent=0 // pred_check
    _
  $region7: #{bn_conv1x1.1} parent=0 // pred_check_branch
    %12 = sbr.rel (0) target = $region9
  $region8: #{bn_conv1x1.1} parent=0 // pred_region
    _
  $region9: #{bn_conv1x1.1} parent=0 // pred_fallthru
    _
  // Predicated region
  $region10: #{bn_conv1x1.1} parent=0 // pred_check
    _
  $region11: #{bn_conv1x1.1} parent=0 // pred_check_branch
    %14 = sbr.rel (0) target = $region13
  $region12: #{bn_conv1x1.1} parent=0 // pred_region
    _
  $region13: #{bn_conv1x1.1} parent=0 // pred_fallthru
    _
  // Predicated region
  $region14: #{bn_conv1x1.1} parent=0 // pred_check
    _
  $region15: #{bn_conv1x1.1} parent=0 // pred_check_branch
    %16 = sbr.rel (0) target = $region17
  $region16: #{bn_conv1x1.1} parent=0 // pred_region
    _
  $region17: #{bn_conv1x1.1} parent=0 // pred_fallthru
    _
  %v18 = vld [vmem:[%s0] sm:$0xff]
  %v19 = vld [vmem:[%s0 + $0x8] sm:$0xff]
  %v20 = vld [vmem:[%s0 + $0x10] sm:$0xff]
  %v21 = vld [vmem:[%s0 + $0x18] sm:$0xff]
  %v22 = vld [vmem:[%s0 + $0x20] sm:$0xff]
  %v23 = vld [vmem:[%s0 + $0x28] sm:$0xff]
  %v24 = vld [vmem:[%s0 + $0x30] sm:$0xff]
  %v25 = vld [vmem:[%s0 + $0x38] sm:$0xff]
  %v26 = vld [vmem:[%s0 + $0x40] sm:$0xff]
  %v27 = vld [vmem:[%s0 + $0x48] sm:$0xff]
  %v28 = vld [vmem:[%s0 + $0x50] sm:$0xff]
  %v29 = vld [vmem:[%s0 + $0x58] sm:$0xff]
  %v30 = vld [vmem:[%s0 + $0x60] sm:$0xff]
  %v31 = vld [vmem:[%s0 + $0x68] sm:$0xff]
  %v32 = vld [vmem:[%s0 + $0x70] sm:$0xff]
  %v33 = vld [vmem:[%s0 + $0x78] sm:$0xff]
  %v34 = vld [vmem:[%s0 + $0x80] sm:$0xff]
  %v35 = vld [vmem:[%s0 + $0x88] sm:$0xff]
  %v36 = vld [vmem:[%s0 + $0x90] sm:$0xff]
  %v37 = vld [vmem:[%s0 + $0x98] sm:$0xff]
  %v38 = vld [vmem:[%s0 + $0xa0] sm:$0xff]
  %v39 = vld [vmem:[%s0 + $0xa8] sm:$0xff]
  %v40 = vld [vmem:[%s0 + $0xb0] sm:$0xff]
  %v41 = vld [vmem:[%s0 + $0xb8] sm:$0xff]
  %v42 = vld [vmem:[%s0 + $0xc0] sm:$0xff]
  %v43 = vld [vmem:[%s0 + $0xc8] sm:$0xff]
  %v44 = vld [vmem:[%s0 + $0xd0] sm:$0xff]
  %v45 = vld [vmem:[%s0 + $0xd8] sm:$0xff]
  %v46 = vld [vmem:[%s0 + $0xe0] sm:$0xff]
  %v47 = vld [vmem:[%s0 + $0xe8] sm:$0xff]
  %v48 = vld [vmem:[%s0 + $0xf0] sm:$0xff]
  %v49 = vld [vmem:[%s0 + $0xf8] sm:$0xff]
  %v50 = vld [vmem:[%s0 + $0x100] sm:$0xff]
  %v51 = vld [vmem:[%s0 + $0x108] sm:$0xff]
  %vm52 = vcmask 556032
  %v53 = vsel %vm52, %v19, 0.0
  %v54 = vadd.f32 %v18, %v53
  %55 = vadd.xlane.f32.xlu0 %v54
  %v56 = vpop.xlane.xlu0 %55
  %v57 = vsel %vm52, %v21, 0.0
  %v58 = vadd.f32 %v20, %v57
  %59 = vadd.xlane.f32.xlu0 %v58
  %v60 = vpop.xlane.xlu0 %59
  %v61 = vsel %vm52, %v23, 0.0
  %v62 = vadd.f32 %v22, %v61
  %63 = vadd.xlane.f32.xlu0 %v62
  %v64 = vpop.xlane.xlu0 %63
  %v65 = vsel %vm52, %v25, 0.0
  %v66 = vadd.f32 %v24, %v65
  %67 = vadd.xlane.f32.xlu0 %v66
  %v68 = vpop.xlane.xlu0 %67
  %v69 = vsel %vm52, %v27, 0.0
  %v70 = vadd.f32 %v26, %v69
  %71 = vadd.xlane.f32.xlu0 %v70
  %v72 = vpop.xlane.xlu0 %71
  %v73 = vsel %vm52, %v29, 0.0
  %v74 = vadd.f32 %v28, %v73
  %75 = vadd.xlane.f32.xlu0 %v74
  %v76 = vpop.xlane.xlu0 %75
  %v77 = vsel %vm52, %v31, 0.0
  %v78 = vadd.f32 %v30, %v77
  %79 = vadd.xlane.f32.xlu0 %v78
  %v80 = vpop.xlane.xlu0 %79
  %v81 = vsel %vm52, %v33, 0.0
  %v82 = vadd.f32 %v32, %v81
  %83 = vadd.xlane.f32.xlu0 %v82
  %v84 = vpop.xlane.xlu0 %83
  %v85 = vsel %vm52, %v35, 0.0
  %v86 = vadd.f32 %v34, %v85
  %87 = vadd.xlane.f32.xlu0 %v86
  %v88 = vpop.xlane.xlu0 %87
  %v89 = vsel %vm52, %v37, 0.0
  %v90 = vadd.f32 %v36, %v89
  %91 = vadd.xlane.f32.xlu0 %v90
  %v92 = vpop.xlane.xlu0 %91
  %v93 = vsel %vm52, %v39, 0.0
  %v94 = vadd.f32 %v38, %v93
  %95 = vadd.xlane.f32.xlu0 %v94
  %v96 = vpop.xlane.xlu0 %95
  %v97 = vsel %vm52, %v41, 0.0
  %v98 = vadd.f32 %v40, %v97
  %99 = vadd.xlane.f32.xlu0 %v98
  %v100 = vpop.xlane.xlu0 %99
  %v101 = vsel %vm52, %v43, 0.0
  %v102 = vadd.f32 %v42, %v101
  %103 = vadd.xlane.f32.xlu0 %v102
  %v104 = vpop.xlane.xlu0 %103
  %v105 = vsel %vm52, %v45, 0.0
  %v106 = vadd.f32 %v44, %v105
  %107 = vadd.xlane.f32.xlu0 %v106
  %v108 = vpop.xlane.xlu0 %107
  %v109 = vsel %vm52, %v47, 0.0
  %v110 = vadd.f32 %v46, %v109
  %111 = vadd.xlane.f32.xlu0 %v110
  %v112 = vpop.xlane.xlu0 %111
  %v113 = vsel %vm52, %v49, 0.0
  %v114 = vadd.f32 %v48, %v113
  %115 = vadd.xlane.f32.xlu0 %v114
  %v116 = vpop.xlane.xlu0 %115
  %v117 = vsel %vm52, %v51, 0.0
  %v118 = vadd.f32 %v50, %v117
  %119 = vadd.xlane.f32.xlu0 %v118
  %v120 = vpop.xlane.xlu0 %119
  %v121 = vmul.f32 %v56, 0.0051020407
  %v122 = vmul.f32 %v60, 0.0051020407
  %v123 = vmul.f32 %v64, 0.0051020407
  %v124 = vmul.f32 %v68, 0.0051020407
  %v125 = vmul.f32 %v72, 0.0051020407
  %v126 = vmul.f32 %v76, 0.0051020407
  %v127 = vmul.f32 %v80, 0.0051020407
  %v128 = vmul.f32 %v84, 0.0051020407
  %v129 = vmul.f32 %v88, 0.0051020407
  %v130 = vmul.f32 %v92, 0.0051020407
  %v131 = vmul.f32 %v96, 0.0051020407
  %v132 = vmul.f32 %v100, 0.0051020407
  %v133 = vmul.f32 %v104, 0.0051020407
  %v134 = vmul.f32 %v108, 0.0051020407
  %v135 = vmul.f32 %v112, 0.0051020407
  %v136 = vmul.f32 %v116, 0.0051020407
  %v137 = vmul.f32 %v120, 0.0051020407
  %v138 = vsub.f32 %v18, %v121
  %v139 = vsub.f32 %v19, %v121
  %v140 = vsub.f32 %v20, %v122
  %v141 = vsub.f32 %v21, %v122
  %v142 = vsub.f32 %v22, %v123
  %v143 = vsub.f32 %v23, %v123
  %v144 = vsub.f32 %v24, %v124
  %v145 = vsub.f32 %v25, %v124
  %v146 = vsub.f32 %v26, %v125
  %v147 = vsub.f32 %v27, %v125
  %v148 = vsub.f32 %v28, %v126
  %v149 = vsub.f32 %v29, %v126
  %v150 = vsub.f32 %v30, %v127
  %v151 = vsub.f32 %v31, %v127
  %v152 = vsub.f32 %v32, %v128
  %v153 = vsub.f32 %v33, %v128
  %v154 = vsub.f32 %v34, %v129
  %v155 = vsub.f32 %v35, %v129
  %v156 = vsub.f32 %v36, %v130
  %v157 = vsub.f32 %v37, %v130
  %v158 = vsub.f32 %v38, %v131
  %v159 = vsub.f32 %v39, %v131
  %v160 = vsub.f32 %v40, %v132
  %v161 = vsub.f32 %v41, %v132
  %v162 = vsub.f32 %v42, %v133
  %v163 = vsub.f32 %v43, %v133
  %v164 = vsub.f32 %v44, %v134
  %v165 = vsub.f32 %v45, %v134
  %v166 = vsub.f32 %v46, %v135
  %v167 = vsub.f32 %v47, %v135
  %v168 = vsub.f32 %v48, %v136
  %v169 = vsub.f32 %v49, %v136
  %v170 = vsub.f32 %v50, %v137
  %v171 = vsub.f32 %v51, %v137
  %v172 = vmul.f32 %v138, %v138
  %v173 = vmul.f32 %v139, %v139
  %v174 = vmul.f32 %v140, %v140
  %v175 = vmul.f32 %v141, %v141
  %v176 = vmul.f32 %v142, %v142
  %v177 = vmul.f32 %v143, %v143
  %v178 = vmul.f32 %v144, %v144
  %v179 = vmul.f32 %v145, %v145
  %v180 = vmul.f32 %v146, %v146
  %v181 = vmul.f32 %v147, %v147
  %v182 = vmul.f32 %v148, %v148
  %v183 = vmul.f32 %v149, %v149
  %v184 = vmul.f32 %v150, %v150
  %v185 = vmul.f32 %v151, %v151
  %v186 = vmul.f32 %v152, %v152
  %v187 = vmul.f32 %v153, %v153
  %v188 = vmul.f32 %v154, %v154
  %v189 = vmul.f32 %v155, %v155
  %v190 = vmul.f32 %v156, %v156
  %v191 = vmul.f32 %v157, %v157
  %v192 = vmul.f32 %v158, %v158
  %v193 = vmul.f32 %v159, %v159
  %v194 = vmul.f32 %v160, %v160
  %v195 = vmul.f32 %v161, %v161
  %v196 = vmul.f32 %v162, %v162
  %v197 = vmul.f32 %v163, %v163
  %v198 = vmul.f32 %v164, %v164
  %v199 = vmul.f32 %v165, %v165
  %v200 = vmul.f32 %v166, %v166
  %v201 = vmul.f32 %v167, %v167
  %v202 = vmul.f32 %v168, %v168
  %v203 = vmul.f32 %v169, %v169
  %v204 = vmul.f32 %v170, %v170
  %v205 = vmul.f32 %v171, %v171
  %v206 = vsel %vm52, %v173, 0.0
  %v207 = vadd.f32 %v172, %v206
  %208 = vadd.xlane.f32.xlu0 %v207
  %v209 = vpop.xlane.xlu0 %208
  %v210 = vsel %vm52, %v175, 0.0
  %v211 = vadd.f32 %v174, %v210
  %212 = vadd.xlane.f32.xlu0 %v211
  %v213 = vpop.xlane.xlu0 %212
  %v214 = vsel %vm52, %v177, 0.0
  %v215 = vadd.f32 %v176, %v214
  %216 = vadd.xlane.f32.xlu0 %v215
  %v217 = vpop.xlane.xlu0 %216
  %v218 = vsel %vm52, %v179, 0.0
  %v219 = vadd.f32 %v178, %v218
  %220 = vadd.xlane.f32.xlu0 %v219
  %v221 = vpop.xlane.xlu0 %220
  %v222 = vsel %vm52, %v181, 0.0
  %v223 = vadd.f32 %v180, %v222
  %224 = vadd.xlane.f32.xlu0 %v223
  %v225 = vpop.xlane.xlu0 %224
  %v226 = vsel %vm52, %v183, 0.0
  %v227 = vadd.f32 %v182, %v226
  %228 = vadd.xlane.f32.xlu0 %v227
  %v229 = vpop.xlane.xlu0 %228
  %v230 = vsel %vm52, %v185, 0.0
  %v231 = vadd.f32 %v184, %v230
  %232 = vadd.xlane.f32.xlu0 %v231
  %v233 = vpop.xlane.xlu0 %232
  %v234 = vsel %vm52, %v187, 0.0
  %v235 = vadd.f32 %v186, %v234
  %236 = vadd.xlane.f32.xlu0 %v235
  %v237 = vpop.xlane.xlu0 %236
  %v238 = vsel %vm52, %v189, 0.0
  %v239 = vadd.f32 %v188, %v238
  %240 = vadd.xlane.f32.xlu0 %v239
  %v241 = vpop.xlane.xlu0 %240
  %v242 = vsel %vm52, %v191, 0.0
  %v243 = vadd.f32 %v190, %v242
  %244 = vadd.xlane.f32.xlu0 %v243
  %v245 = vpop.xlane.xlu0 %244
  %v246 = vsel %vm52, %v193, 0.0
  %v247 = vadd.f32 %v192, %v246
  %248 = vadd.xlane.f32.xlu0 %v247
  %v249 = vpop.xlane.xlu0 %248
  %v250 = vsel %vm52, %v195, 0.0
  %v251 = vadd.f32 %v194, %v250
  %252 = vadd.xlane.f32.xlu0 %v251
  %v253 = vpop.xlane.xlu0 %252
  %v254 = vsel %vm52, %v197, 0.0
  %v255 = vadd.f32 %v196, %v254
  %256 = vadd.xlane.f32.xlu0 %v255
  %v257 = vpop.xlane.xlu0 %256
  %v258 = vsel %vm52, %v199, 0.0
  %v259 = vadd.f32 %v198, %v258
  %260 = vadd.xlane.f32.xlu0 %v259
  %v261 = vpop.xlane.xlu0 %260
  %v262 = vsel %vm52, %v201, 0.0
  %v263 = vadd.f32 %v200, %v262
  %264 = vadd.xlane.f32.xlu0 %v263
  %v265 = vpop.xlane.xlu0 %264
  %v266 = vsel %vm52, %v203, 0.0
  %v267 = vadd.f32 %v202, %v266
  %268 = vadd.xlane.f32.xlu0 %v267
  %v269 = vpop.xlane.xlu0 %268
  %v270 = vsel %vm52, %v205, 0.0
  %v271 = vadd.f32 %v204, %v270
  %272 = vadd.xlane.f32.xlu0 %v271
  %v273 = vpop.xlane.xlu0 %272
  %v274 = vmul.f32 %v209, 0.0051020407
  %v275 = vmul.f32 %v213, 0.0051020407
  %v276 = vmul.f32 %v217, 0.0051020407
  %v277 = vmul.f32 %v221, 0.0051020407
  %v278 = vmul.f32 %v225, 0.0051020407
  %v279 = vmul.f32 %v229, 0.0051020407
  %v280 = vmul.f32 %v233, 0.0051020407
  %v281 = vmul.f32 %v237, 0.0051020407
  %v282 = vmul.f32 %v241, 0.0051020407
  %v283 = vmul.f32 %v245, 0.0051020407
  %v284 = vmul.f32 %v249, 0.0051020407
  %v285 = vmul.f32 %v253, 0.0051020407
  %v286 = vmul.f32 %v257, 0.0051020407
  %v287 = vmul.f32 %v261, 0.0051020407
  %v288 = vmul.f32 %v265, 0.0051020407
  %v289 = vmul.f32 %v269, 0.0051020407
  %v290 = vmul.f32 %v273, 0.0051020407
  %v291 = vadd.f32 %v274, 1e-05
  %v292 = vadd.f32 %v275, 1e-05
  %v293 = vadd.f32 %v276, 1e-05
  %v294 = vadd.f32 %v277, 1e-05
  %v295 = vadd.f32 %v278, 1e-05
  %v296 = vadd.f32 %v279, 1e-05
  %v297 = vadd.f32 %v280, 1e-05
  %v298 = vadd.f32 %v281, 1e-05
  %v299 = vadd.f32 %v282, 1e-05
  %v300 = vadd.f32 %v283, 1e-05
  %v301 = vadd.f32 %v284, 1e-05
  %v302 = vadd.f32 %v285, 1e-05
  %v303 = vadd.f32 %v286, 1e-05
  %v304 = vadd.f32 %v287, 1e-05
  %v305 = vadd.f32 %v288, 1e-05
  %v306 = vadd.f32 %v289, 1e-05
  %v307 = vadd.f32 %v290, 1e-05
  %v308 = vrsqrt.pop %v291
  %v309 = vmul.f32 %v308, %v291
  %v310 = vmul.f32 %v309, %v308
  %v311 = vmul.f32 0.5, %v310
  %v312 = vsub.f32 1.5, %v311
  %v313 = vmul.f32 %v308, %v312
  %vm314 = vweird.f32 %v291
  %vm315 = vweird.f32 %v308
  %vm316 = vmor %vm314, %vm315
  %v317 = vsel %vm316, %v308, %v313
  %v318 = vrsqrt.pop %v292
  %v319 = vmul.f32 %v318, %v292
  %v320 = vmul.f32 %v319, %v318
  %v321 = vmul.f32 0.5, %v320
  %v322 = vsub.f32 1.5, %v321
  %v323 = vmul.f32 %v318, %v322
  %vm324 = vweird.f32 %v292
  %vm325 = vweird.f32 %v318
  %vm326 = vmor %vm324, %vm325
  %v327 = vsel %vm326, %v318, %v323
  %v328 = vrsqrt.pop %v293
  %v329 = vmul.f32 %v328, %v293
  %v330 = vmul.f32 %v329, %v328
  %v331 = vmul.f32 0.5, %v330
  %v332 = vsub.f32 1.5, %v331
  %v333 = vmul.f32 %v328, %v332
  %vm334 = vweird.f32 %v293
  %vm335 = vweird.f32 %v328
  %vm336 = vmor %vm334, %vm335
  %v337 = vsel %vm336, %v328, %v333
  %v338 = vrsqrt.pop %v294
  %v339 = vmul.f32 %v338, %v294
  %v340 = vmul.f32 %v339, %v338
  %v341 = vmul.f32 0.5, %v340
  %v342 = vsub.f32 1.5, %v341
  %v343 = vmul.f32 %v338, %v342
  %vm344 = vweird.f32 %v294
  %vm345 = vweird.f32 %v338
  %vm346 = vmor %vm344, %vm345
  %v347 = vsel %vm346, %v338, %v343
  %v348 = vrsqrt.pop %v295
  %v349 = vmul.f32 %v348, %v295
  %v350 = vmul.f32 %v349, %v348
  %v351 = vmul.f32 0.5, %v350
  %v352 = vsub.f32 1.5, %v351
  %v353 = vmul.f32 %v348, %v352
  %vm354 = vweird.f32 %v295
  %vm355 = vweird.f32 %v348
  %vm356 = vmor %vm354, %vm355
  %v357 = vsel %vm356, %v348, %v353
  %v358 = vrsqrt.pop %v296
  %v359 = vmul.f32 %v358, %v296
  %v360 = vmul.f32 %v359, %v358
  %v361 = vmul.f32 0.5, %v360
  %v362 = vsub.f32 1.5, %v361
  %v363 = vmul.f32 %v358, %v362
  %vm364 = vweird.f32 %v296
  %vm365 = vweird.f32 %v358
  %vm366 = vmor %vm364, %vm365
  %v367 = vsel %vm366, %v358, %v363
  %v368 = vrsqrt.pop %v297
  %v369 = vmul.f32 %v368, %v297
  %v370 = vmul.f32 %v369, %v368
  %v371 = vmul.f32 0.5, %v370
  %v372 = vsub.f32 1.5, %v371
  %v373 = vmul.f32 %v368, %v372
  %vm374 = vweird.f32 %v297
  %vm375 = vweird.f32 %v368
  %vm376 = vmor %vm374, %vm375
  %v377 = vsel %vm376, %v368, %v373
  %v378 = vrsqrt.pop %v298
  %v379 = vmul.f32 %v378, %v298
  %v380 = vmul.f32 %v379, %v378
  %v381 = vmul.f32 0.5, %v380
  %v382 = vsub.f32 1.5, %v381
  %v383 = vmul.f32 %v378, %v382
  %vm384 = vweird.f32 %v298
  %vm385 = vweird.f32 %v378
  %vm386 = vmor %vm384, %vm385
  %v387 = vsel %vm386, %v378, %v383
  %v388 = vrsqrt.pop %v299
  %v389 = vmul.f32 %v388, %v299
  %v390 = vmul.f32 %v389, %v388
  %v391 = vmul.f32 0.5, %v390
  %v392 = vsub.f32 1.5, %v391
  %v393 = vmul.f32 %v388, %v392
  %vm394 = vweird.f32 %v299
  %vm395 = vweird.f32 %v388
  %vm396 = vmor %vm394, %vm395
  %v397 = vsel %vm396, %v388, %v393
  %v398 = vrsqrt.pop %v300
  %v399 = vmul.f32 %v398, %v300
  %v400 = vmul.f32 %v399, %v398
  %v401 = vmul.f32 0.5, %v400
  %v402 = vsub.f32 1.5, %v401
  %v403 = vmul.f32 %v398, %v402
  %vm404 = vweird.f32 %v300
  %vm405 = vweird.f32 %v398
  %vm406 = vmor %vm404, %vm405
  %v407 = vsel %vm406, %v398, %v403
  %v408 = vrsqrt.pop %v301
  %v409 = vmul.f32 %v408, %v301
  %v410 = vmul.f32 %v409, %v408
  %v411 = vmul.f32 0.5, %v410
  %v412 = vsub.f32 1.5, %v411
  %v413 = vmul.f32 %v408, %v412
  %vm414 = vweird.f32 %v301
  %vm415 = vweird.f32 %v408
  %vm416 = vmor %vm414, %vm415
  %v417 = vsel %vm416, %v408, %v413
  %v418 = vrsqrt.pop %v302
  %v419 = vmul.f32 %v418, %v302
  %v420 = vmul.f32 %v419, %v418
  %v421 = vmul.f32 0.5, %v420
  %v422 = vsub.f32 1.5, %v421
  %v423 = vmul.f32 %v418, %v422
  %vm424 = vweird.f32 %v302
  %vm425 = vweird.f32 %v418
  %vm426 = vmor %vm424, %vm425
  %v427 = vsel %vm426, %v418, %v423
  %v428 = vrsqrt.pop %v303
  %v429 = vmul.f32 %v428, %v303
  %v430 = vmul.f32 %v429, %v428
  %v431 = vmul.f32 0.5, %v430
  %v432 = vsub.f32 1.5, %v431
  %v433 = vmul.f32 %v428, %v432
  %vm434 = vweird.f32 %v303
  %vm435 = vweird.f32 %v428
  %vm436 = vmor %vm434, %vm435
  %v437 = vsel %vm436, %v428, %v433
  %v438 = vrsqrt.pop %v304
  %v439 = vmul.f32 %v438, %v304
  %v440 = vmul.f32 %v439, %v438
  %v441 = vmul.f32 0.5, %v440
  %v442 = vsub.f32 1.5, %v441
  %v443 = vmul.f32 %v438, %v442
  %vm444 = vweird.f32 %v304
  %vm445 = vweird.f32 %v438
  %vm446 = vmor %vm444, %vm445
  %v447 = vsel %vm446, %v438, %v443
  %v448 = vrsqrt.pop %v305
  %v449 = vmul.f32 %v448, %v305
  %v450 = vmul.f32 %v449, %v448
  %v451 = vmul.f32 0.5, %v450
  %v452 = vsub.f32 1.5, %v451
  %v453 = vmul.f32 %v448, %v452
  %vm454 = vweird.f32 %v305
  %vm455 = vweird.f32 %v448
  %vm456 = vmor %vm454, %vm455
  %v457 = vsel %vm456, %v448, %v453
  %v458 = vrsqrt.pop %v306
  %v459 = vmul.f32 %v458, %v306
  %v460 = vmul.f32 %v459, %v458
  %v461 = vmul.f32 0.5, %v460
  %v462 = vsub.f32 1.5, %v461
  %v463 = vmul.f32 %v458, %v462
  %vm464 = vweird.f32 %v306
  %vm465 = vweird.f32 %v458
  %vm466 = vmor %vm464, %vm465
  %v467 = vsel %vm466, %v458, %v463
  %v468 = vrsqrt.pop %v307
  %v469 = vmul.f32 %v468, %v307
  %v470 = vmul.f32 %v469, %v468
  %v471 = vmul.f32 0.5, %v470
  %v472 = vsub.f32 1.5, %v471
  %v473 = vmul.f32 %v468, %v472
  %vm474 = vweird.f32 %v307
  %vm475 = vweird.f32 %v468
  %vm476 = vmor %vm474, %vm475
  %v477 = vsel %vm476, %v468, %v473
  %v478 = vld [vmem:[%s1] sm:$0xff]
  %v479 = vld [vmem:[%s1 + $0x8] sm:$0xff]
  %v480 = vld [vmem:[%s1 + $0x10] sm:$0xff]
  %v481 = vld [vmem:[%s1 + $0x18] sm:$0xff]
  %v482 = vld [vmem:[%s1 + $0x20] sm:$0xff]
  %v483 = vld [vmem:[%s1 + $0x28] sm:$0xff]
  %v484 = vld [vmem:[%s1 + $0x30] sm:$0xff]
  %v485 = vld [vmem:[%s1 + $0x38] sm:$0xff]
  %v486 = vld [vmem:[%s1 + $0x40] sm:$0xff]
  %v487 = vld [vmem:[%s1 + $0x48] sm:$0xff]
  %v488 = vld [vmem:[%s1 + $0x50] sm:$0xff]
  %v489 = vld [vmem:[%s1 + $0x58] sm:$0xff]
  %v490 = vld [vmem:[%s1 + $0x60] sm:$0xff]
  %v491 = vld [vmem:[%s1 + $0x68] sm:$0xff]
  %v492 = vld [vmem:[%s1 + $0x70] sm:$0xff]
  %v493 = vld [vmem:[%s1 + $0x78] sm:$0xff]
  %v494 = vld [vmem:[%s1 + $0x80] sm:$0xff]
  %v495 = vmul.f32 %v478, %v317
  %v496 = vmul.f32 %v479, %v327
  %v497 = vmul.f32 %v480, %v337
  %v498 = vmul.f32 %v481, %v347
  %v499 = vmul.f32 %v482, %v357
  %v500 = vmul.f32 %v483, %v367
  %v501 = vmul.f32 %v484, %v377
  %v502 = vmul.f32 %v485, %v387
  %v503 = vmul.f32 %v486, %v397
  %v504 = vmul.f32 %v487, %v407
  %v505 = vmul.f32 %v488, %v417
  %v506 = vmul.f32 %v489, %v427
  %v507 = vmul.f32 %v490, %v437
  %v508 = vmul.f32 %v491, %v447
  %v509 = vmul.f32 %v492, %v457
  %v510 = vmul.f32 %v493, %v467
  %v511 = vmul.f32 %v494, %v477
  %513 = vset.pattern.permute.xlu0 0
  %514 = vperm.xlu0 %513, %v495
  %v515 = vpop.permute.xlu0 %514
  %518 = vset.pattern.permute.xlu0 0
  %519 = vperm.xlu0 %518, %v496
  %v520 = vpop.permute.xlu0 %519
  %523 = vset.pattern.permute.xlu0 0
  %524 = vperm.xlu0 %523, %v497
  %v525 = vpop.permute.xlu0 %524
  %528 = vset.pattern.permute.xlu0 0
  %529 = vperm.xlu0 %528, %v498
  %v530 = vpop.permute.xlu0 %529
  %533 = vset.pattern.permute.xlu0 0
  %534 = vperm.xlu0 %533, %v499
  %v535 = vpop.permute.xlu0 %534
  %538 = vset.pattern.permute.xlu0 0
  %539 = vperm.xlu0 %538, %v500
  %v540 = vpop.permute.xlu0 %539
  %543 = vset.pattern.permute.xlu0 0
  %544 = vperm.xlu0 %543, %v501
  %v545 = vpop.permute.xlu0 %544
  %548 = vset.pattern.permute.xlu0 0
  %549 = vperm.xlu0 %548, %v502
  %v550 = vpop.permute.xlu0 %549
  %553 = vset.pattern.permute.xlu0 0
  %554 = vperm.xlu0 %553, %v503
  %v555 = vpop.permute.xlu0 %554
  %558 = vset.pattern.permute.xlu0 0
  %559 = vperm.xlu0 %558, %v504
  %v560 = vpop.permute.xlu0 %559
  %563 = vset.pattern.permute.xlu0 0
  %564 = vperm.xlu0 %563, %v505
  %v565 = vpop.permute.xlu0 %564
  %568 = vset.pattern.permute.xlu0 0
  %569 = vperm.xlu0 %568, %v506
  %v570 = vpop.permute.xlu0 %569
  %573 = vset.pattern.permute.xlu0 0
  %574 = vperm.xlu0 %573, %v507
  %v575 = vpop.permute.xlu0 %574
  %578 = vset.pattern.permute.xlu0 0
  %579 = vperm.xlu0 %578, %v508
  %v580 = vpop.permute.xlu0 %579
  %583 = vset.pattern.permute.xlu0 0
  %584 = vperm.xlu0 %583, %v509
  %v585 = vpop.permute.xlu0 %584
  %588 = vset.pattern.permute.xlu0 0
  %589 = vperm.xlu0 %588, %v510
  %v590 = vpop.permute.xlu0 %589
  %593 = vset.pattern.permute.xlu0 0
  %594 = vperm.xlu0 %593, %v511
  %v595 = vpop.permute.xlu0 %594
  %v597 = vmul.f32 %v138, %v515
  %v598 = vmul.f32 %v139, %v515
  %v599 = vmul.f32 %v140, %v520
  %v600 = vmul.f32 %v141, %v520
  %v601 = vmul.f32 %v142, %v525
  %v602 = vmul.f32 %v143, %v525
  %v603 = vmul.f32 %v144, %v530
  %v604 = vmul.f32 %v145, %v530
  %v605 = vmul.f32 %v146, %v535
  %v606 = vmul.f32 %v147, %v535
  %v607 = vmul.f32 %v148, %v540
  %v608 = vmul.f32 %v149, %v540
  %v609 = vmul.f32 %v150, %v545
  %v610 = vmul.f32 %v151, %v545
  %v611 = vmul.f32 %v152, %v550
  %v612 = vmul.f32 %v153, %v550
  %v613 = vmul.f32 %v154, %v555
  %v614 = vmul.f32 %v155, %v555
  %v615 = vmul.f32 %v156, %v560
  %v616 = vmul.f32 %v157, %v560
  %v617 = vmul.f32 %v158, %v565
  %v618 = vmul.f32 %v159, %v565
  %v619 = vmul.f32 %v160, %v570
  %v620 = vmul.f32 %v161, %v570
  %v621 = vmul.f32 %v162, %v575
  %v622 = vmul.f32 %v163, %v575
  %v623 = vmul.f32 %v164, %v580
  %v624 = vmul.f32 %v165, %v580
  %v625 = vmul.f32 %v166, %v585
  %v626 = vmul.f32 %v167, %v585
  %v627 = vmul.f32 %v168, %v590
  %v628 = vmul.f32 %v169, %v590
  %v629 = vmul.f32 %v170, %v595
  %v630 = vmul.f32 %v171, %v595
  %v631 = vld [vmem:[%s2] sm:$0xff]
  %v632 = vld [vmem:[%s2 + $0x8] sm:$0xff]
  %v633 = vld [vmem:[%s2 + $0x10] sm:$0xff]
  %v634 = vld [vmem:[%s2 + $0x18] sm:$0xff]
  %v635 = vld [vmem:[%s2 + $0x20] sm:$0xff]
  %v636 = vld [vmem:[%s2 + $0x28] sm:$0xff]
  %v637 = vld [vmem:[%s2 + $0x30] sm:$0xff]
  %v638 = vld [vmem:[%s2 + $0x38] sm:$0xff]
  %v639 = vld [vmem:[%s2 + $0x40] sm:$0xff]
  %v640 = vld [vmem:[%s2 + $0x48] sm:$0xff]
  %v641 = vld [vmem:[%s2 + $0x50] sm:$0xff]
  %v642 = vld [vmem:[%s2 + $0x58] sm:$0xff]
  %v643 = vld [vmem:[%s2 + $0x60] sm:$0xff]
  %v644 = vld [vmem:[%s2 + $0x68] sm:$0xff]
  %v645 = vld [vmem:[%s2 + $0x70] sm:$0xff]
  %v646 = vld [vmem:[%s2 + $0x78] sm:$0xff]
  %v647 = vld [vmem:[%s2 + $0x80] sm:$0xff]
  %649 = vset.pattern.permute.xlu0 0
  %650 = vperm.xlu0 %649, %v631
  %v651 = vpop.permute.xlu0 %650
  %654 = vset.pattern.permute.xlu0 0
  %655 = vperm.xlu0 %654, %v632
  %v656 = vpop.permute.xlu0 %655
  %659 = vset.pattern.permute.xlu0 0
  %660 = vperm.xlu0 %659, %v633
  %v661 = vpop.permute.xlu0 %660
  %664 = vset.pattern.permute.xlu0 0
  %665 = vperm.xlu0 %664, %v634
  %v666 = vpop.permute.xlu0 %665
  %669 = vset.pattern.permute.xlu0 0
  %670 = vperm.xlu0 %669, %v635
  %v671 = vpop.permute.xlu0 %670
  %674 = vset.pattern.permute.xlu0 0
  %675 = vperm.xlu0 %674, %v636
  %v676 = vpop.permute.xlu0 %675
  %679 = vset.pattern.permute.xlu0 0
  %680 = vperm.xlu0 %679, %v637
  %v681 = vpop.permute.xlu0 %680
  %684 = vset.pattern.permute.xlu0 0
  %685 = vperm.xlu0 %684, %v638
  %v686 = vpop.permute.xlu0 %685
  %689 = vset.pattern.permute.xlu0 0
  %690 = vperm.xlu0 %689, %v639
  %v691 = vpop.permute.xlu0 %690
  %694 = vset.pattern.permute.xlu0 0
  %695 = vperm.xlu0 %694, %v640
  %v696 = vpop.permute.xlu0 %695
  %699 = vset.pattern.permute.xlu0 0
  %700 = vperm.xlu0 %699, %v641
  %v701 = vpop.permute.xlu0 %700
  %704 = vset.pattern.permute.xlu0 0
  %705 = vperm.xlu0 %704, %v642
  %v706 = vpop.permute.xlu0 %705
  %709 = vset.pattern.permute.xlu0 0
  %710 = vperm.xlu0 %709, %v643
  %v711 = vpop.permute.xlu0 %710
  %714 = vset.pattern.permute.xlu0 0
  %715 = vperm.xlu0 %714, %v644
  %v716 = vpop.permute.xlu0 %715
  %719 = vset.pattern.permute.xlu0 0
  %720 = vperm.xlu0 %719, %v645
  %v721 = vpop.permute.xlu0 %720
  %724 = vset.pattern.permute.xlu0 0
  %725 = vperm.xlu0 %724, %v646
  %v726 = vpop.permute.xlu0 %725
  %729 = vset.pattern.permute.xlu0 0
  %730 = vperm.xlu0 %729, %v647
  %v731 = vpop.permute.xlu0 %730
  %v733 = vadd.f32 %v597, %v651
  %v734 = vadd.f32 %v598, %v651
  %v735 = vadd.f32 %v599, %v656
  %v736 = vadd.f32 %v600, %v656
  %v737 = vadd.f32 %v601, %v661
  %v738 = vadd.f32 %v602, %v661
  %v739 = vadd.f32 %v603, %v666
  %v740 = vadd.f32 %v604, %v666
  %v741 = vadd.f32 %v605, %v671
  %v742 = vadd.f32 %v606, %v671
  %v743 = vadd.f32 %v607, %v676
  %v744 = vadd.f32 %v608, %v676
  %v745 = vadd.f32 %v609, %v681
  %v746 = vadd.f32 %v610, %v681
  %v747 = vadd.f32 %v611, %v686
  %v748 = vadd.f32 %v612, %v686
  %v749 = vadd.f32 %v613, %v691
  %v750 = vadd.f32 %v614, %v691
  %v751 = vadd.f32 %v615, %v696
  %v752 = vadd.f32 %v616, %v696
  %v753 = vadd.f32 %v617, %v701
  %v754 = vadd.f32 %v618, %v701
  %v755 = vadd.f32 %v619, %v706
  %v756 = vadd.f32 %v620, %v706
  %v757 = vadd.f32 %v621, %v711
  %v758 = vadd.f32 %v622, %v711
  %v759 = vadd.f32 %v623, %v716
  %v760 = vadd.f32 %v624, %v716
  %v761 = vadd.f32 %v625, %v721
  %v762 = vadd.f32 %v626, %v721
  %v763 = vadd.f32 %v627, %v726
  %v764 = vadd.f32 %v628, %v726
  %v765 = vadd.f32 %v629, %v731
  %v766 = vadd.f32 %v630, %v731
  %v767 = vpack.c.bf16 %v735, %v733
  %v768 = vpack.c.bf16 %v736, %v734
  %v769 = vpack.c.bf16 %v739, %v737
  %v770 = vpack.c.bf16 %v740, %v738
  %v771 = vpack.c.bf16 %v743, %v741
  %v772 = vpack.c.bf16 %v744, %v742
  %v773 = vpack.c.bf16 %v747, %v745
  %v774 = vpack.c.bf16 %v748, %v746
  %v775 = vpack.c.bf16 %v751, %v749
  %v776 = vpack.c.bf16 %v752, %v750
  %v777 = vpack.c.bf16 %v755, %v753
  %v778 = vpack.c.bf16 %v756, %v754
  %v779 = vpack.c.bf16 %v759, %v757
  %v780 = vpack.c.bf16 %v760, %v758
  %v781 = vpack.c.bf16 %v763, %v761
  %v782 = vpack.c.bf16 %v764, %v762
  %v783 = vpack.c.bf16 %v765, %v765
  %v784 = vpack.c.bf16 %v766, %v766
  %v785 = vld [vmem:[%s3] sm:$0xff]
  %v786 = vld [vmem:[%s3 + $0x8] sm:$0xff]
  %v787 = vld [vmem:[%s3 + $0x10] sm:$0xff]
  %v788 = vld [vmem:[%s3 + $0x18] sm:$0xff]
  %v789 = vld [vmem:[%s3 + $0x20] sm:$0xff]
  %v790 = vld [vmem:[%s3 + $0x28] sm:$0xff]
  %v791 = vld [vmem:[%s3 + $0x30] sm:$0xff]
  %v792 = vld [vmem:[%s3 + $0x38] sm:$0xff]
  %v793 = vld [vmem:[%s3 + $0x40] sm:$0xff]
  %v794 = vld [vmem:[%s3 + $0x48] sm:$0xff]
  %v795 = vld [vmem:[%s3 + $0x50] sm:$0xff]
  %v796 = vld [vmem:[%s3 + $0x58] sm:$0xff]
  %v797 = vld [vmem:[%s3 + $0x60] sm:$0xff]
  %v798 = vld [vmem:[%s3 + $0x68] sm:$0xff]
  %v799 = vld [vmem:[%s3 + $0x70] sm:$0xff]
  %v800 = vld [vmem:[%s3 + $0x78] sm:$0xff]
  %v801 = vld [vmem:[%s3 + $0x80] sm:$0xff]
  %v802 = vld [vmem:[%s3 + $0x88] sm:$0xff]
  %v803 = vld [vmem:[%s3 + $0x90] sm:$0xff]
  %v804 = vld [vmem:[%s3 + $0x98] sm:$0xff]
  %v805 = vld [vmem:[%s3 + $0xa0] sm:$0xff]
  %v806 = vld [vmem:[%s3 + $0xa8] sm:$0xff]
  %v807 = vld [vmem:[%s3 + $0xb0] sm:$0xff]
  %v808 = vld [vmem:[%s3 + $0xb8] sm:$0xff]
  %v809 = vld [vmem:[%s3 + $0xc0] sm:$0xff]
  %v810 = vld [vmem:[%s3 + $0xc8] sm:$0xff]
  %v811 = vld [vmem:[%s3 + $0xd0] sm:$0xff]
  %v812 = vld [vmem:[%s3 + $0xd8] sm:$0xff]
  %v813 = vld [vmem:[%s3 + $0xe0] sm:$0xff]
  %v814 = vld [vmem:[%s3 + $0xe8] sm:$0xff]
  %v815 = vld [vmem:[%s3 + $0xf0] sm:$0xff]
  %v816 = vld [vmem:[%s3 + $0xf8] sm:$0xff]
  %v817 = vld [vmem:[%s3 + $0x100] sm:$0xff]
  %v818 = vld [vmem:[%s3 + $0x108] sm:$0xff]
  %v819 = vld [vmem:[%s3 + $0x110] sm:$0xff]
  %v820 = vld [vmem:[%s3 + $0x118] sm:$0xff]
  %v821 = vld [vmem:[%s3 + $0x120] sm:$0xff]
  %v822 = vld [vmem:[%s3 + $0x128] sm:$0xff]
  %v823 = vld [vmem:[%s3 + $0x130] sm:$0xff]
  %v824 = vld [vmem:[%s3 + $0x138] sm:$0xff]
  %v825 = vld [vmem:[%s3 + $0x140] sm:$0xff]
  %v826 = vld [vmem:[%s3 + $0x148] sm:$0xff]
  %v827 = vld [vmem:[%s3 + $0x150] sm:$0xff]
  %v828 = vld [vmem:[%s3 + $0x158] sm:$0xff]
  %v829 = vld [vmem:[%s3 + $0x160] sm:$0xff]
  %v830 = vld [vmem:[%s3 + $0x168] sm:$0xff]
  %v831 = vld [vmem:[%s3 + $0x170] sm:$0xff]
  %v832 = vld [vmem:[%s3 + $0x178] sm:$0xff]
  %v833 = vld [vmem:[%s3 + $0x180] sm:$0xff]
  %v834 = vld [vmem:[%s3 + $0x188] sm:$0xff]
  %v835 = vld [vmem:[%s3 + $0x190] sm:$0xff]
  %v836 = vld [vmem:[%s3 + $0x198] sm:$0xff]
  %v837 = vld [vmem:[%s3 + $0x1a0] sm:$0xff]
  %v838 = vld [vmem:[%s3 + $0x1a8] sm:$0xff]
  %v839 = vld [vmem:[%s3 + $0x1b0] sm:$0xff]
  %v840 = vld [vmem:[%s3 + $0x1b8] sm:$0xff]
  %v841 = vld [vmem:[%s3 + $0x1c0] sm:$0xff]
  %v842 = vld [vmem:[%s3 + $0x1c8] sm:$0xff]
  %v843 = vld [vmem:[%s3 + $0x1d0] sm:$0xff]
  %v844 = vld [vmem:[%s3 + $0x1d8] sm:$0xff]
  %v845 = vld [vmem:[%s3 + $0x1e0] sm:$0xff]
  %v846 = vld [vmem:[%s3 + $0x1e8] sm:$0xff]
  %v847 = vld [vmem:[%s3 + $0x1f0] sm:$0xff]
  %v848 = vld [vmem:[%s3 + $0x1f8] sm:$0xff]
  %v849 = vld [vmem:[%s3 + $0x200] sm:$0xff]
  %v850 = vld [vmem:[%s3 + $0x208] sm:$0xff]
  %v851 = vld [vmem:[%s3 + $0x210] sm:$0xff]
  %v852 = vld [vmem:[%s3 + $0x218] sm:$0xff]
  %v853 = vld [vmem:[%s3 + $0x220] sm:$0xff]
  %v854 = vld [vmem:[%s3 + $0x228] sm:$0xff]
  %v855 = vld [vmem:[%s3 + $0x230] sm:$0xff]
  %v856 = vld [vmem:[%s3 + $0x238] sm:$0xff]
  %v857 = vld [vmem:[%s3 + $0x240] sm:$0xff]
  %v858 = vld [vmem:[%s3 + $0x248] sm:$0xff]
  %v859 = vld [vmem:[%s3 + $0x250] sm:$0xff]
  %v860 = vld [vmem:[%s3 + $0x258] sm:$0xff]
  %v861 = vld [vmem:[%s3 + $0x260] sm:$0xff]
  %v862 = vld [vmem:[%s3 + $0x268] sm:$0xff]
  %v863 = vld [vmem:[%s3 + $0x270] sm:$0xff]
  %v864 = vld [vmem:[%s3 + $0x278] sm:$0xff]
  %v865 = vld [vmem:[%s3 + $0x280] sm:$0xff]
  %v866 = vld [vmem:[%s3 + $0x288] sm:$0xff]
  %v867 = vld [vmem:[%s3 + $0x290] sm:$0xff]
  %v868 = vld [vmem:[%s3 + $0x298] sm:$0xff]
  %v869 = vld [vmem:[%s3 + $0x2a0] sm:$0xff]
  %v870 = vld [vmem:[%s3 + $0x2a8] sm:$0xff]
  %v871 = vld [vmem:[%s3 + $0x2b0] sm:$0xff]
  %v872 = vld [vmem:[%s3 + $0x2b8] sm:$0xff]
  %v873 = vld [vmem:[%s3 + $0x2c0] sm:$0xff]
  %v874 = vld [vmem:[%s3 + $0x2c8] sm:$0xff]
  %v875 = vld [vmem:[%s3 + $0x2d0] sm:$0xff]
  %v876 = vld [vmem:[%s3 + $0x2d8] sm:$0xff]
  %v877 = vld [vmem:[%s3 + $0x2e0] sm:$0xff]
  %v878 = vld [vmem:[%s3 + $0x2e8] sm:$0xff]
  %v879 = vld [vmem:[%s3 + $0x2f0] sm:$0xff]
  %v880 = vld [vmem:[%s3 + $0x2f8] sm:$0xff]
  %v881 = vld [vmem:[%s3 + $0x300] sm:$0xff]
  %v882 = vld [vmem:[%s3 + $0x308] sm:$0xff]
  %v883 = vld [vmem:[%s3 + $0x310] sm:$0xff]
  %v884 = vld [vmem:[%s3 + $0x318] sm:$0xff]
  %v885 = vld [vmem:[%s3 + $0x320] sm:$0xff]
  %v886 = vld [vmem:[%s3 + $0x328] sm:$0xff]
  %v989 = vunpack.c.l.b16 %v785
  %v990 = vunpack.c.h.b16 %v785
  %v991 = vunpack.c.l.b16 %v786
  %v992 = vunpack.c.h.b16 %v786
  %v993 = vunpack.c.l.b16 %v787
  %v994 = vunpack.c.h.b16 %v787
  %v995 = vunpack.c.l.b16 %v788
  %v996 = vunpack.c.h.b16 %v788
  %v997 = vunpack.c.l.b16 %v789
  %v998 = vunpack.c.h.b16 %v789
  %v999 = vunpack.c.l.b16 %v790
  %v1000 = vunpack.c.h.b16 %v790
  %v1001 = vunpack.c.l.b16 %v791
  %v1002 = vunpack.c.h.b16 %v791
  %v1003 = vunpack.c.l.b16 %v792
  %v1004 = vunpack.c.h.b16 %v792
  %v1005 = vunpack.c.l.b16 %v793
  %v1006 = vunpack.c.h.b16 %v793
  %v1007 = vunpack.c.l.b16 %v794
  %v1008 = vunpack.c.h.b16 %v794
  %v1009 = vunpack.c.l.b16 %v795
  %v1010 = vunpack.c.h.b16 %v795
  %v1011 = vunpack.c.l.b16 %v796
  %v1012 = vunpack.c.h.b16 %v796
  %v1013 = vunpack.c.l.b16 %v797
  %v1014 = vunpack.c.h.b16 %v797
  %v1015 = vunpack.c.l.b16 %v798
  %v1016 = vunpack.c.h.b16 %v798
  %v1017 = vunpack.c.l.b16 %v799
  %v1018 = vunpack.c.h.b16 %v799
  %v1019 = vunpack.c.l.b16 %v800
  %v1020 = vunpack.c.h.b16 %v800
  %v1021 = vunpack.c.l.b16 %v801
  %v1022 = vunpack.c.h.b16 %v801
  %v1023 = vunpack.c.l.b16 %v802
  %v1024 = vunpack.c.h.b16 %v802
  %v1025 = vunpack.c.l.b16 %v803
  %v1026 = vunpack.c.h.b16 %v803
  %v1027 = vunpack.c.l.b16 %v804
  %v1028 = vunpack.c.h.b16 %v804
  %v1029 = vunpack.c.l.b16 %v805
  %v1030 = vunpack.c.h.b16 %v805
  %v1031 = vunpack.c.l.b16 %v806
  %v1032 = vunpack.c.h.b16 %v806
  %v1033 = vunpack.c.l.b16 %v807
  %v1034 = vunpack.c.h.b16 %v807
  %v1035 = vunpack.c.l.b16 %v808
  %v1036 = vunpack.c.h.b16 %v808
  %v1037 = vunpack.c.l.b16 %v809
  %v1038 = vunpack.c.h.b16 %v809
  %v1039 = vunpack.c.l.b16 %v810
  %v1040 = vunpack.c.h.b16 %v810
  %v1041 = vunpack.c.l.b16 %v811
  %v1042 = vunpack.c.h.b16 %v811
  %v1043 = vunpack.c.l.b16 %v812
  %v1044 = vunpack.c.h.b16 %v812
  %v1045 = vunpack.c.l.b16 %v813
  %v1046 = vunpack.c.h.b16 %v813
  %v1047 = vunpack.c.l.b16 %v814
  %v1048 = vunpack.c.h.b16 %v814
  %v1049 = vunpack.c.l.b16 %v815
  %v1050 = vunpack.c.h.b16 %v815
  %v1051 = vunpack.c.l.b16 %v816
  %v1052 = vunpack.c.h.b16 %v816
  %v1053 = vunpack.c.l.b16 %v817
  %v1054 = vunpack.c.h.b16 %v817
  %v1055 = vunpack.c.l.b16 %v818
  %v1056 = vunpack.c.h.b16 %v818
  %v1057 = vunpack.c.l.b16 %v819
  %v1058 = vunpack.c.h.b16 %v819
  %v1059 = vunpack.c.l.b16 %v820
  %v1060 = vunpack.c.h.b16 %v820
  %v1061 = vunpack.c.l.b16 %v821
  %v1062 = vunpack.c.h.b16 %v821
  %v1063 = vunpack.c.l.b16 %v822
  %v1064 = vunpack.c.h.b16 %v822
  %v1065 = vunpack.c.l.b16 %v823
  %v1066 = vunpack.c.h.b16 %v823
  %v1067 = vunpack.c.l.b16 %v824
  %v1068 = vunpack.c.h.b16 %v824
  %v1069 = vunpack.c.l.b16 %v825
  %v1070 = vunpack.c.h.b16 %v825
  %v1071 = vunpack.c.l.b16 %v826
  %v1072 = vunpack.c.h.b16 %v826
  %v1073 = vunpack.c.l.b16 %v827
  %v1074 = vunpack.c.h.b16 %v827
  %v1075 = vunpack.c.l.b16 %v828
  %v1076 = vunpack.c.h.b16 %v828
  %v1077 = vunpack.c.l.b16 %v829
  %v1078 = vunpack.c.h.b16 %v829
  %v1079 = vunpack.c.l.b16 %v830
  %v1080 = vunpack.c.h.b16 %v830
  %v1081 = vunpack.c.l.b16 %v831
  %v1082 = vunpack.c.h.b16 %v831
  %v1083 = vunpack.c.l.b16 %v832
  %v1084 = vunpack.c.h.b16 %v832
  %v1085 = vunpack.c.l.b16 %v833
  %v1086 = vunpack.c.h.b16 %v833
  %v1087 = vunpack.c.l.b16 %v834
  %v1088 = vunpack.c.h.b16 %v834
  %v1089 = vunpack.c.l.b16 %v835
  %v1090 = vunpack.c.h.b16 %v835
  %v1091 = vunpack.c.l.b16 %v836
  %v1092 = vunpack.c.h.b16 %v836
  %v1093 = vunpack.c.l.b16 %v837
  %v1094 = vunpack.c.h.b16 %v837
  %v1095 = vunpack.c.l.b16 %v838
  %v1096 = vunpack.c.h.b16 %v838
  %v1097 = vunpack.c.l.b16 %v839
  %v1098 = vunpack.c.h.b16 %v839
  %v1099 = vunpack.c.l.b16 %v840
  %v1100 = vunpack.c.h.b16 %v840
  %v1101 = vunpack.c.l.b16 %v841
  %v1102 = vunpack.c.h.b16 %v841
  %v1103 = vunpack.c.l.b16 %v842
  %v1104 = vunpack.c.h.b16 %v842
  %v1105 = vunpack.c.l.b16 %v843
  %v1106 = vunpack.c.h.b16 %v843
  %v1107 = vunpack.c.l.b16 %v844
  %v1108 = vunpack.c.h.b16 %v844
  %v1109 = vunpack.c.l.b16 %v845
  %v1110 = vunpack.c.h.b16 %v845
  %v1111 = vunpack.c.l.b16 %v846
  %v1112 = vunpack.c.h.b16 %v846
  %v1113 = vunpack.c.l.b16 %v847
  %v1114 = vunpack.c.h.b16 %v847
  %v1115 = vunpack.c.l.b16 %v848
  %v1116 = vunpack.c.h.b16 %v848
  %v1117 = vunpack.c.l.b16 %v849
  %v1118 = vunpack.c.h.b16 %v849
  %v1119 = vunpack.c.l.b16 %v850
  %v1120 = vunpack.c.h.b16 %v850
  %v1121 = vunpack.c.l.b16 %v851
  %v1122 = vunpack.c.h.b16 %v851
  %v1123 = vunpack.c.l.b16 %v852
  %v1124 = vunpack.c.h.b16 %v852
  %v1125 = vunpack.c.l.b16 %v853
  %v1126 = vunpack.c.h.b16 %v853
  %v1127 = vunpack.c.l.b16 %v854
  %v1128 = vunpack.c.h.b16 %v854
  %v1129 = vunpack.c.l.b16 %v855
  %v1130 = vunpack.c.h.b16 %v855
  %v1131 = vunpack.c.l.b16 %v856
  %v1132 = vunpack.c.h.b16 %v856
  %v1133 = vunpack.c.l.b16 %v857
  %v1134 = vunpack.c.h.b16 %v857
  %v1135 = vunpack.c.l.b16 %v858
  %v1136 = vunpack.c.h.b16 %v858
  %v1137 = vunpack.c.l.b16 %v859
  %v1138 = vunpack.c.h.b16 %v859
  %v1139 = vunpack.c.l.b16 %v860
  %v1140 = vunpack.c.h.b16 %v860
  %v1141 = vunpack.c.l.b16 %v861
  %v1142 = vunpack.c.h.b16 %v861
  %v1143 = vunpack.c.l.b16 %v862
  %v1144 = vunpack.c.h.b16 %v862
  %v1145 = vunpack.c.l.b16 %v863
  %v1146 = vunpack.c.h.b16 %v863
  %v1147 = vunpack.c.l.b16 %v864
  %v1148 = vunpack.c.h.b16 %v864
  %v1149 = vunpack.c.l.b16 %v865
  %v1150 = vunpack.c.h.b16 %v865
  %v1151 = vunpack.c.l.b16 %v866
  %v1152 = vunpack.c.h.b16 %v866
  %v1153 = vunpack.c.l.b16 %v867
  %v1154 = vunpack.c.h.b16 %v867
  %v1155 = vunpack.c.l.b16 %v868
  %v1156 = vunpack.c.h.b16 %v868
  %v1157 = vunpack.c.l.b16 %v869
  %v1158 = vunpack.c.h.b16 %v869
  %v1159 = vunpack.c.l.b16 %v870
  %v1160 = vunpack.c.h.b16 %v870
  %v1161 = vunpack.c.l.b16 %v871
  %v1162 = vunpack.c.h.b16 %v871
  %v1163 = vunpack.c.l.b16 %v872
  %v1164 = vunpack.c.h.b16 %v872
  %v1165 = vunpack.c.l.b16 %v873
  %v1166 = vunpack.c.h.b16 %v873
  %v1167 = vunpack.c.l.b16 %v874
  %v1168 = vunpack.c.h.b16 %v874
  %v1169 = vunpack.c.l.b16 %v875
  %v1170 = vunpack.c.h.b16 %v875
  %v1171 = vunpack.c.l.b16 %v876
  %v1172 = vunpack.c.h.b16 %v876
  %v1173 = vunpack.c.l.b16 %v877
  %v1174 = vunpack.c.h.b16 %v877
  %v1175 = vunpack.c.l.b16 %v878
  %v1176 = vunpack.c.h.b16 %v878
  %v1177 = vunpack.c.l.b16 %v879
  %v1178 = vunpack.c.h.b16 %v879
  %v1179 = vunpack.c.l.b16 %v880
  %v1180 = vunpack.c.h.b16 %v880
  %v1181 = vunpack.c.l.b16 %v881
  %v1182 = vunpack.c.h.b16 %v881
  %v1183 = vunpack.c.l.b16 %v882
  %v1184 = vunpack.c.h.b16 %v882
  %v1185 = vunpack.c.l.b16 %v883
  %v1186 = vunpack.c.h.b16 %v883
  %v1187 = vunpack.c.l.b16 %v884
  %v1188 = vunpack.c.h.b16 %v884
  %v1189 = vunpack.c.l.b16 %v885
  %v1190 = vunpack.c.h.b16 %v885
  %v1191 = vunpack.c.l.b16 %v886
  %v1192 = vunpack.c.h.b16 %v886
  %v1193 = vpack.c.b16 %v991, %v989
  %v1194 = vpack.c.b16 %v992, %v990
  %v1195 = vpack.c.b16 %v995, %v993
  %v1196 = vpack.c.b16 %v996, %v994
  %v1197 = vpack.c.b16 %v999, %v997
  %v1198 = vpack.c.b16 %v1000, %v998
  %v1199 = vpack.c.b16 %v1003, %v1001
  %v1200 = vpack.c.b16 %v1004, %v1002
  %v1201 = vpack.c.b16 %v1007, %v1005
  %v1202 = vpack.c.b16 %v1008, %v1006
  %v1203 = vpack.c.b16 %v1011, %v1009
  %v1204 = vpack.c.b16 %v1012, %v1010
  %v1205 = vpack.c.b16 %v1015, %v1013
  %v1206 = vpack.c.b16 %v1016, %v1014
  %v1207 = vpack.c.b16 %v1019, %v1017
  %v1208 = vpack.c.b16 %v1020, %v1018
  %v1209 = vpack.c.b16 %v1023, %v1021
  %v1210 = vpack.c.b16 %v1024, %v1022
  %v1211 = vpack.c.b16 %v1027, %v1025
  %v1212 = vpack.c.b16 %v1028, %v1026
  %v1213 = vpack.c.b16 %v1031, %v1029
  %v1214 = vpack.c.b16 %v1032, %v1030
  %v1215 = vpack.c.b16 %v1035, %v1033
  %v1216 = vpack.c.b16 %v1036, %v1034
  %v1217 = vpack.c.b16 %v1039, %v1037
  %v1218 = vpack.c.b16 %v1040, %v1038
  %v1219 = vpack.c.b16 %v1043, %v1041
  %v1220 = vpack.c.b16 %v1044, %v1042
  %v1221 = vpack.c.b16 %v1047, %v1045
  %v1222 = vpack.c.b16 %v1048, %v1046
  %v1223 = vpack.c.b16 %v1051, %v1049
  %v1224 = vpack.c.b16 %v1052, %v1050
  %v1225 = vpack.c.b16 %v1055, %v1053
  %v1226 = vpack.c.b16 %v1056, %v1054
  %v1227 = vpack.c.b16 %v1059, %v1057
  %v1228 = vpack.c.b16 %v1060, %v1058
  %v1229 = vpack.c.b16 %v1063, %v1061
  %v1230 = vpack.c.b16 %v1064, %v1062
  %v1231 = vpack.c.b16 %v1067, %v1065
  %v1232 = vpack.c.b16 %v1068, %v1066
  %v1233 = vpack.c.b16 %v1071, %v1069
  %v1234 = vpack.c.b16 %v1072, %v1070
  %v1235 = vpack.c.b16 %v1075, %v1073
  %v1236 = vpack.c.b16 %v1076, %v1074
  %v1237 = vpack.c.b16 %v1079, %v1077
  %v1238 = vpack.c.b16 %v1080, %v1078
  %v1239 = vpack.c.b16 %v1083, %v1081
  %v1240 = vpack.c.b16 %v1084, %v1082
  %v1241 = vpack.c.b16 %v1087, %v1085
  %v1242 = vpack.c.b16 %v1088, %v1086
  %v1243 = vpack.c.b16 %v1091, %v1089
  %v1244 = vpack.c.b16 %v1092, %v1090
  %v1245 = vpack.c.b16 %v1095, %v1093
  %v1246 = vpack.c.b16 %v1096, %v1094
  %v1247 = vpack.c.b16 %v1099, %v1097
  %v1248 = vpack.c.b16 %v1100, %v1098
  %v1249 = vpack.c.b16 %v1103, %v1101
  %v1250 = vpack.c.b16 %v1104, %v1102
  %v1251 = vpack.c.b16 %v1107, %v1105
  %v1252 = vpack.c.b16 %v1108, %v1106
  %v1253 = vpack.c.b16 %v1111, %v1109
  %v1254 = vpack.c.b16 %v1112, %v1110
  %v1255 = vpack.c.b16 %v1115, %v1113
  %v1256 = vpack.c.b16 %v1116, %v1114
  %v1257 = vpack.c.b16 %v1119, %v1117
  %v1258 = vpack.c.b16 %v1120, %v1118
  %v1259 = vpack.c.b16 %v1123, %v1121
  %v1260 = vpack.c.b16 %v1124, %v1122
  %v1261 = vpack.c.b16 %v1127, %v1125
  %v1262 = vpack.c.b16 %v1128, %v1126
  %v1263 = vpack.c.b16 %v1131, %v1129
  %v1264 = vpack.c.b16 %v1132, %v1130
  %v1265 = vpack.c.b16 %v1135, %v1133
  %v1266 = vpack.c.b16 %v1136, %v1134
  %v1267 = vpack.c.b16 %v1139, %v1137
  %v1268 = vpack.c.b16 %v1140, %v1138
  %v1269 = vpack.c.b16 %v1143, %v1141
  %v1270 = vpack.c.b16 %v1144, %v1142
  %v1271 = vpack.c.b16 %v1147, %v1145
  %v1272 = vpack.c.b16 %v1148, %v1146
  %v1273 = vpack.c.b16 %v1151, %v1149
  %v1274 = vpack.c.b16 %v1152, %v1150
  %v1275 = vpack.c.b16 %v1155, %v1153
  %v1276 = vpack.c.b16 %v1156, %v1154
  %v1277 = vpack.c.b16 %v1159, %v1157
  %v1278 = vpack.c.b16 %v1160, %v1158
  %v1279 = vpack.c.b16 %v1163, %v1161
  %v1280 = vpack.c.b16 %v1164, %v1162
  %v1281 = vpack.c.b16 %v1167, %v1165
  %v1282 = vpack.c.b16 %v1168, %v1166
  %v1283 = vpack.c.b16 %v1171, %v1169
  %v1284 = vpack.c.b16 %v1172, %v1170
  %v1285 = vpack.c.b16 %v1175, %v1173
  %v1286 = vpack.c.b16 %v1176, %v1174
  %v1287 = vpack.c.b16 %v1179, %v1177
  %v1288 = vpack.c.b16 %v1180, %v1178
  %v1289 = vpack.c.b16 %v1183, %v1181
  %v1290 = vpack.c.b16 %v1184, %v1182
  %v1291 = vpack.c.b16 %v1187, %v1185
  %v1292 = vpack.c.b16 %v1188, %v1186
  %v1293 = vpack.c.b16 %v1191, %v1189
  %v1294 = vpack.c.b16 %v1192, %v1190
  %vm1346 = vcmask 64512
  %v1348 = vsel %vm1346, %v1194, 0
  %v1351 = vsel %vm1346, %v1196, 0
  %v1354 = vsel %vm1346, %v1198, 0
  %v1357 = vsel %vm1346, %v1200, 0
  %v1360 = vsel %vm1346, %v1202, 0
  %v1363 = vsel %vm1346, %v1204, 0
  %v1366 = vsel %vm1346, %v1206, 0
  %v1369 = vsel %vm1346, %v1208, 0
  %v1372 = vsel %vm1346, %v1210, 0
  %v1375 = vsel %vm1346, %v1212, 0
  %v1378 = vsel %vm1346, %v1214, 0
  %v1381 = vsel %vm1346, %v1216, 0
  %v1384 = vsel %vm1346, %v1218, 0
  %v1387 = vsel %vm1346, %v1220, 0
  %v1390 = vsel %vm1346, %v1222, 0
  %v1393 = vsel %vm1346, %v1224, 0
  %v1396 = vsel %vm1346, %v1226, 0
  %v1399 = vsel %vm1346, %v1228, 0
  %v1402 = vsel %vm1346, %v1230, 0
  %v1405 = vsel %vm1346, %v1232, 0
  %v1408 = vsel %vm1346, %v1234, 0
  %v1411 = vsel %vm1346, %v1236, 0
  %v1414 = vsel %vm1346, %v1238, 0
  %v1417 = vsel %vm1346, %v1240, 0
  %v1420 = vsel %vm1346, %v1242, 0
  %v1423 = vsel %vm1346, %v1244, 0
  %v1426 = vsel %vm1346, %v1246, 0
  %v1429 = vsel %vm1346, %v1248, 0
  %v1432 = vsel %vm1346, %v1250, 0
  %v1435 = vsel %vm1346, %v1252, 0
  %v1438 = vsel %vm1346, %v1254, 0
  %v1441 = vsel %vm1346, %v1256, 0
  %v1444 = vsel %vm1346, %v1258, 0
  %v1447 = vsel %vm1346, %v1260, 0
  %v1450 = vsel %vm1346, %v1262, 0
  %v1453 = vsel %vm1346, %v1264, 0
  %v1456 = vsel %vm1346, %v1266, 0
  %v1459 = vsel %vm1346, %v1268, 0
  %v1462 = vsel %vm1346, %v1270, 0
  %v1465 = vsel %vm1346, %v1272, 0
  %v1468 = vsel %vm1346, %v1274, 0
  %v1471 = vsel %vm1346, %v1276, 0
  %v1474 = vsel %vm1346, %v1278, 0
  %v1477 = vsel %vm1346, %v1280, 0
  %v1480 = vsel %vm1346, %v1282, 0
  %v1483 = vsel %vm1346, %v1284, 0
  %v1486 = vsel %vm1346, %v1286, 0
  %v1489 = vsel %vm1346, %v1288, 0
  %v1492 = vsel %vm1346, %v1290, 0
  %v1495 = vsel %vm1346, %v1292, 0
  %v1498 = vsel %vm1346, %v1294, 0
  %vm1500 = vcmask 1043456
  %v1502 = vsel %vm1500, %v783, 0
  %v1505 = vsel %vm1500, %v784, 0
  %1507 = vmatpush.bf16.msra.mxu0 %v781
  %1508 = vmatpush.bf16.msra.mxu0 %v779
  %1509 = vmatpush.bf16.msra.mxu0 %v777
  %1510 = vmatpush.bf16.msra.mxu0 %v775
  %1511 = vmatpush.bf16.msra.mxu0 %v773
  %1512 = vmatpush.bf16.msra.mxu0 %v771
  %1513 = vmatpush.bf16.msra.mxu0 %v769
  %1514 = vmatpush.bf16.msra.mxu0 %v767
  %1515 = vmatmul.bf16.gmra.mxu0 %v1193
  %v1516 = vpop.f32.mrf.mxu0
  %v1517 = vadd.f32 0.0, %v1516
  %v1518 = vpop.f32.mrf.mxu0
  %v1519 = vadd.f32 0.0, %v1518
  %1520 = vmatmul.bf16.gmra.mxu0 %v1195
  %v1521 = vpop.f32.mrf.mxu0
  %v1522 = vadd.f32 0.0, %v1521
  %v1523 = vpop.f32.mrf.mxu0
  %v1524 = vadd.f32 0.0, %v1523
  %1525 = vmatmul.bf16.gmra.mxu0 %v1197
  %v1526 = vpop.f32.mrf.mxu0
  %v1527 = vadd.f32 0.0, %v1526
  %v1528 = vpop.f32.mrf.mxu0
  %v1529 = vadd.f32 0.0, %v1528
  %1530 = vmatmul.bf16.gmra.mxu0 %v1199
  %v1531 = vpop.f32.mrf.mxu0
  %v1532 = vadd.f32 0.0, %v1531
  %v1533 = vpop.f32.mrf.mxu0
  %v1534 = vadd.f32 0.0, %v1533
  %1535 = vmatmul.bf16.gmra.mxu0 %v1201
  %v1536 = vpop.f32.mrf.mxu0
  %v1537 = vadd.f32 0.0, %v1536
  %v1538 = vpop.f32.mrf.mxu0
  %v1539 = vadd.f32 0.0, %v1538
  %1540 = vmatmul.bf16.gmra.mxu0 %v1203
  %v1541 = vpop.f32.mrf.mxu0
  %v1542 = vadd.f32 0.0, %v1541
  %v1543 = vpop.f32.mrf.mxu0
  %v1544 = vadd.f32 0.0, %v1543
  %1545 = vmatmul.bf16.gmra.mxu0 %v1205
  %v1546 = vpop.f32.mrf.mxu0
  %v1547 = vadd.f32 0.0, %v1546
  %v1548 = vpop.f32.mrf.mxu0
  %v1549 = vadd.f32 0.0, %v1548
  %1550 = vmatmul.bf16.gmra.mxu0 %v1207
  %v1551 = vpop.f32.mrf.mxu0
  %v1552 = vadd.f32 0.0, %v1551
  %v1553 = vpop.f32.mrf.mxu0
  %v1554 = vadd.f32 0.0, %v1553
  %1555 = vmatmul.bf16.gmra.mxu0 %v1209
  %v1556 = vpop.f32.mrf.mxu0
  %v1557 = vadd.f32 0.0, %v1556
  %v1558 = vpop.f32.mrf.mxu0
  %v1559 = vadd.f32 0.0, %v1558
  %1560 = vmatmul.bf16.gmra.mxu0 %v1211
  %v1561 = vpop.f32.mrf.mxu0
  %v1562 = vadd.f32 0.0, %v1561
  %v1563 = vpop.f32.mrf.mxu0
  %v1564 = vadd.f32 0.0, %v1563
  %1565 = vmatmul.bf16.gmra.mxu0 %v1213
  %v1566 = vpop.f32.mrf.mxu0
  %v1567 = vadd.f32 0.0, %v1566
  %v1568 = vpop.f32.mrf.mxu0
  %v1569 = vadd.f32 0.0, %v1568
  %1570 = vmatmul.bf16.gmra.mxu0 %v1215
  %v1571 = vpop.f32.mrf.mxu0
  %v1572 = vadd.f32 0.0, %v1571
  %v1573 = vpop.f32.mrf.mxu0
  %v1574 = vadd.f32 0.0, %v1573
  %1575 = vmatmul.bf16.gmra.mxu0 %v1217
  %v1576 = vpop.f32.mrf.mxu0
  %v1577 = vadd.f32 0.0, %v1576
  %v1578 = vpop.f32.mrf.mxu0
  %v1579 = vadd.f32 0.0, %v1578
  %1580 = vmatmul.bf16.gmra.mxu0 %v1219
  %v1581 = vpop.f32.mrf.mxu0
  %v1582 = vadd.f32 0.0, %v1581
  %v1583 = vpop.f32.mrf.mxu0
  %v1584 = vadd.f32 0.0, %v1583
  %1585 = vmatmul.bf16.gmra.mxu0 %v1221
  %v1586 = vpop.f32.mrf.mxu0
  %v1587 = vadd.f32 0.0, %v1586
  %v1588 = vpop.f32.mrf.mxu0
  %v1589 = vadd.f32 0.0, %v1588
  %1590 = vmatmul.bf16.gmra.mxu0 %v1223
  %v1591 = vpop.f32.mrf.mxu0
  %v1592 = vadd.f32 0.0, %v1591
  %v1593 = vpop.f32.mrf.mxu0
  %v1594 = vadd.f32 0.0, %v1593
  %1595 = vmatmul.bf16.gmra.mxu0 %v1225
  %v1596 = vpop.f32.mrf.mxu0
  %v1597 = vadd.f32 0.0, %v1596
  %v1598 = vpop.f32.mrf.mxu0
  %v1599 = vadd.f32 0.0, %v1598
  %1600 = vmatmul.bf16.gmra.mxu0 %v1227
  %v1601 = vpop.f32.mrf.mxu0
  %v1602 = vadd.f32 0.0, %v1601
  %v1603 = vpop.f32.mrf.mxu0
  %v1604 = vadd.f32 0.0, %v1603
  %1605 = vmatmul.bf16.gmra.mxu0 %v1229
  %v1606 = vpop.f32.mrf.mxu0
  %v1607 = vadd.f32 0.0, %v1606
  %v1608 = vpop.f32.mrf.mxu0
  %v1609 = vadd.f32 0.0, %v1608
  %1610 = vmatmul.bf16.gmra.mxu0 %v1231
  %v1611 = vpop.f32.mrf.mxu0
  %v1612 = vadd.f32 0.0, %v1611
  %v1613 = vpop.f32.mrf.mxu0
  %v1614 = vadd.f32 0.0, %v1613
  %1615 = vmatmul.bf16.gmra.mxu0 %v1233
  %v1616 = vpop.f32.mrf.mxu0
  %v1617 = vadd.f32 0.0, %v1616
  %v1618 = vpop.f32.mrf.mxu0
  %v1619 = vadd.f32 0.0, %v1618
  %1620 = vmatmul.bf16.gmra.mxu0 %v1235
  %v1621 = vpop.f32.mrf.mxu0
  %v1622 = vadd.f32 0.0, %v1621
  %v1623 = vpop.f32.mrf.mxu0
  %v1624 = vadd.f32 0.0, %v1623
  %1625 = vmatmul.bf16.gmra.mxu0 %v1237
  %v1626 = vpop.f32.mrf.mxu0
  %v1627 = vadd.f32 0.0, %v1626
  %v1628 = vpop.f32.mrf.mxu0
  %v1629 = vadd.f32 0.0, %v1628
  %1630 = vmatmul.bf16.gmra.mxu0 %v1239
  %v1631 = vpop.f32.mrf.mxu0
  %v1632 = vadd.f32 0.0, %v1631
  %v1633 = vpop.f32.mrf.mxu0
  %v1634 = vadd.f32 0.0, %v1633
  %1635 = vmatmul.bf16.gmra.mxu0 %v1241
  %v1636 = vpop.f32.mrf.mxu0
  %v1637 = vadd.f32 0.0, %v1636
  %v1638 = vpop.f32.mrf.mxu0
  %v1639 = vadd.f32 0.0, %v1638
  %1640 = vmatmul.bf16.gmra.mxu0 %v1243
  %v1641 = vpop.f32.mrf.mxu0
  %v1642 = vadd.f32 0.0, %v1641
  %v1643 = vpop.f32.mrf.mxu0
  %v1644 = vadd.f32 0.0, %v1643
  %1645 = vmatmul.bf16.gmra.mxu0 %v1245
  %v1646 = vpop.f32.mrf.mxu0
  %v1647 = vadd.f32 0.0, %v1646
  %v1648 = vpop.f32.mrf.mxu0
  %v1649 = vadd.f32 0.0, %v1648
  %1650 = vmatmul.bf16.gmra.mxu0 %v1247
  %v1651 = vpop.f32.mrf.mxu0
  %v1652 = vadd.f32 0.0, %v1651
  %v1653 = vpop.f32.mrf.mxu0
  %v1654 = vadd.f32 0.0, %v1653
  %1655 = vmatmul.bf16.gmra.mxu0 %v1249
  %v1656 = vpop.f32.mrf.mxu0
  %v1657 = vadd.f32 0.0, %v1656
  %v1658 = vpop.f32.mrf.mxu0
  %v1659 = vadd.f32 0.0, %v1658
  %1660 = vmatmul.bf16.gmra.mxu0 %v1251
  %v1661 = vpop.f32.mrf.mxu0
  %v1662 = vadd.f32 0.0, %v1661
  %v1663 = vpop.f32.mrf.mxu0
  %v1664 = vadd.f32 0.0, %v1663
  %1665 = vmatmul.bf16.gmra.mxu0 %v1253
  %v1666 = vpop.f32.mrf.mxu0
  %v1667 = vadd.f32 0.0, %v1666
  %v1668 = vpop.f32.mrf.mxu0
  %v1669 = vadd.f32 0.0, %v1668
  %1670 = vmatmul.bf16.gmra.mxu0 %v1255
  %v1671 = vpop.f32.mrf.mxu0
  %v1672 = vadd.f32 0.0, %v1671
  %v1673 = vpop.f32.mrf.mxu0
  %v1674 = vadd.f32 0.0, %v1673
  %1675 = vmatmul.bf16.gmra.mxu0 %v1257
  %v1676 = vpop.f32.mrf.mxu0
  %v1677 = vadd.f32 0.0, %v1676
  %v1678 = vpop.f32.mrf.mxu0
  %v1679 = vadd.f32 0.0, %v1678
  %1680 = vmatmul.bf16.gmra.mxu0 %v1259
  %v1681 = vpop.f32.mrf.mxu0
  %v1682 = vadd.f32 0.0, %v1681
  %v1683 = vpop.f32.mrf.mxu0
  %v1684 = vadd.f32 0.0, %v1683
  %1685 = vmatmul.bf16.gmra.mxu0 %v1261
  %v1686 = vpop.f32.mrf.mxu0
  %v1687 = vadd.f32 0.0, %v1686
  %v1688 = vpop.f32.mrf.mxu0
  %v1689 = vadd.f32 0.0, %v1688
  %1690 = vmatmul.bf16.gmra.mxu0 %v1263
  %v1691 = vpop.f32.mrf.mxu0
  %v1692 = vadd.f32 0.0, %v1691
  %v1693 = vpop.f32.mrf.mxu0
  %v1694 = vadd.f32 0.0, %v1693
  %1695 = vmatmul.bf16.gmra.mxu0 %v1265
  %v1696 = vpop.f32.mrf.mxu0
  %v1697 = vadd.f32 0.0, %v1696
  %v1698 = vpop.f32.mrf.mxu0
  %v1699 = vadd.f32 0.0, %v1698
  %1700 = vmatmul.bf16.gmra.mxu0 %v1267
  %v1701 = vpop.f32.mrf.mxu0
  %v1702 = vadd.f32 0.0, %v1701
  %v1703 = vpop.f32.mrf.mxu0
  %v1704 = vadd.f32 0.0, %v1703
  %1705 = vmatmul.bf16.gmra.mxu0 %v1269
  %v1706 = vpop.f32.mrf.mxu0
  %v1707 = vadd.f32 0.0, %v1706
  %v1708 = vpop.f32.mrf.mxu0
  %v1709 = vadd.f32 0.0, %v1708
  %1710 = vmatmul.bf16.gmra.mxu0 %v1271
  %v1711 = vpop.f32.mrf.mxu0
  %v1712 = vadd.f32 0.0, %v1711
  %v1713 = vpop.f32.mrf.mxu0
  %v1714 = vadd.f32 0.0, %v1713
  %1715 = vmatmul.bf16.gmra.mxu0 %v1273
  %v1716 = vpop.f32.mrf.mxu0
  %v1717 = vadd.f32 0.0, %v1716
  %v1718 = vpop.f32.mrf.mxu0
  %v1719 = vadd.f32 0.0, %v1718
  %1720 = vmatmul.bf16.gmra.mxu0 %v1275
  %v1721 = vpop.f32.mrf.mxu0
  %v1722 = vadd.f32 0.0, %v1721
  %v1723 = vpop.f32.mrf.mxu0
  %v1724 = vadd.f32 0.0, %v1723
  %1725 = vmatmul.bf16.gmra.mxu0 %v1277
  %v1726 = vpop.f32.mrf.mxu0
  %v1727 = vadd.f32 0.0, %v1726
  %v1728 = vpop.f32.mrf.mxu0
  %v1729 = vadd.f32 0.0, %v1728
  %1730 = vmatmul.bf16.gmra.mxu0 %v1279
  %v1731 = vpop.f32.mrf.mxu0
  %v1732 = vadd.f32 0.0, %v1731
  %v1733 = vpop.f32.mrf.mxu0
  %v1734 = vadd.f32 0.0, %v1733
  %1735 = vmatmul.bf16.gmra.mxu0 %v1281
  %v1736 = vpop.f32.mrf.mxu0
  %v1737 = vadd.f32 0.0, %v1736
  %v1738 = vpop.f32.mrf.mxu0
  %v1739 = vadd.f32 0.0, %v1738
  %1740 = vmatmul.bf16.gmra.mxu0 %v1283
  %v1741 = vpop.f32.mrf.mxu0
  %v1742 = vadd.f32 0.0, %v1741
  %v1743 = vpop.f32.mrf.mxu0
  %v1744 = vadd.f32 0.0, %v1743
  %1745 = vmatmul.bf16.gmra.mxu0 %v1285
  %v1746 = vpop.f32.mrf.mxu0
  %v1747 = vadd.f32 0.0, %v1746
  %v1748 = vpop.f32.mrf.mxu0
  %v1749 = vadd.f32 0.0, %v1748
  %1750 = vmatmul.bf16.gmra.mxu0 %v1287
  %v1751 = vpop.f32.mrf.mxu0
  %v1752 = vadd.f32 0.0, %v1751
  %v1753 = vpop.f32.mrf.mxu0
  %v1754 = vadd.f32 0.0, %v1753
  %1755 = vmatmul.bf16.gmra.mxu0 %v1289
  %v1756 = vpop.f32.mrf.mxu0
  %v1757 = vadd.f32 0.0, %v1756
  %v1758 = vpop.f32.mrf.mxu0
  %v1759 = vadd.f32 0.0, %v1758
  %1760 = vmatmul.bf16.gmra.mxu0 %v1291
  %v1761 = vpop.f32.mrf.mxu0
  %v1762 = vadd.f32 0.0, %v1761
  %v1763 = vpop.f32.mrf.mxu0
  %v1764 = vadd.f32 0.0, %v1763
  %1765 = vmatmul.bf16.gmra.mxu0 %v1293
  %v1766 = vpop.f32.mrf.mxu0
  %v1767 = vadd.f32 0.0, %v1766
  %v1768 = vpop.f32.mrf.mxu0
  %v1769 = vadd.f32 0.0, %v1768
  %1770 = vdwg.mxu0
  %1771 = vmatpush.bf16.msra.mxu0 0
  %1772 = vmatpush.bf16.msra.mxu0 0
  %1773 = vmatpush.bf16.msra.mxu0 0
  %1774 = vmatpush.bf16.msra.mxu0 0
  %1775 = vmatpush.bf16.msra.mxu0 0
  %1776 = vmatpush.bf16.msra.mxu0 0
  %1777 = vmatpush.bf16.msra.mxu0 0
  %1778 = vmatpush.bf16.msra.mxu0 %v1502
  %1779 = vmatmul.bf16.gmra.mxu0 %v1348
  %v1780 = vpop.f32.mrf.mxu0
  %v1781 = vadd.f32 %v1517, %v1780
  %v1782 = vpop.f32.mrf.mxu0
  %v1783 = vadd.f32 %v1519, %v1782
  %1784 = vmatmul.bf16.gmra.mxu0 %v1351
  %v1785 = vpop.f32.mrf.mxu0
  %v1786 = vadd.f32 %v1522, %v1785
  %v1787 = vpop.f32.mrf.mxu0
  %v1788 = vadd.f32 %v1524, %v1787
  %1789 = vmatmul.bf16.gmra.mxu0 %v1354
  %v1790 = vpop.f32.mrf.mxu0
  %v1791 = vadd.f32 %v1527, %v1790
  %v1792 = vpop.f32.mrf.mxu0
  %v1793 = vadd.f32 %v1529, %v1792
  %1794 = vmatmul.bf16.gmra.mxu0 %v1357
  %v1795 = vpop.f32.mrf.mxu0
  %v1796 = vadd.f32 %v1532, %v1795
  %v1797 = vpop.f32.mrf.mxu0
  %v1798 = vadd.f32 %v1534, %v1797
  %1799 = vmatmul.bf16.gmra.mxu0 %v1360
  %v1800 = vpop.f32.mrf.mxu0
  %v1801 = vadd.f32 %v1537, %v1800
  %v1802 = vpop.f32.mrf.mxu0
  %v1803 = vadd.f32 %v1539, %v1802
  %1804 = vmatmul.bf16.gmra.mxu0 %v1363
  %v1805 = vpop.f32.mrf.mxu0
  %v1806 = vadd.f32 %v1542, %v1805
  %v1807 = vpop.f32.mrf.mxu0
  %v1808 = vadd.f32 %v1544, %v1807
  %1809 = vmatmul.bf16.gmra.mxu0 %v1366
  %v1810 = vpop.f32.mrf.mxu0
  %v1811 = vadd.f32 %v1547, %v1810
  %v1812 = vpop.f32.mrf.mxu0
  %v1813 = vadd.f32 %v1549, %v1812
  %1814 = vmatmul.bf16.gmra.mxu0 %v1369
  %v1815 = vpop.f32.mrf.mxu0
  %v1816 = vadd.f32 %v1552, %v1815
  %v1817 = vpop.f32.mrf.mxu0
  %v1818 = vadd.f32 %v1554, %v1817
  %1819 = vmatmul.bf16.gmra.mxu0 %v1372
  %v1820 = vpop.f32.mrf.mxu0
  %v1821 = vadd.f32 %v1557, %v1820
  %v1822 = vpop.f32.mrf.mxu0
  %v1823 = vadd.f32 %v1559, %v1822
  %1824 = vmatmul.bf16.gmra.mxu0 %v1375
  %v1825 = vpop.f32.mrf.mxu0
  %v1826 = vadd.f32 %v1562, %v1825
  %v1827 = vpop.f32.mrf.mxu0
  %v1828 = vadd.f32 %v1564, %v1827
  %1829 = vmatmul.bf16.gmra.mxu0 %v1378
  %v1830 = vpop.f32.mrf.mxu0
  %v1831 = vadd.f32 %v1567, %v1830
  %v1832 = vpop.f32.mrf.mxu0
  %v1833 = vadd.f32 %v1569, %v1832
  %1834 = vmatmul.bf16.gmra.mxu0 %v1381
  %v1835 = vpop.f32.mrf.mxu0
  %v1836 = vadd.f32 %v1572, %v1835
  %v1837 = vpop.f32.mrf.mxu0
  %v1838 = vadd.f32 %v1574, %v1837
  %1839 = vmatmul.bf16.gmra.mxu0 %v1384
  %v1840 = vpop.f32.mrf.mxu0
  %v1841 = vadd.f32 %v1577, %v1840
  %v1842 = vpop.f32.mrf.mxu0
  %v1843 = vadd.f32 %v1579, %v1842
  %1844 = vmatmul.bf16.gmra.mxu0 %v1387
  %v1845 = vpop.f32.mrf.mxu0
  %v1846 = vadd.f32 %v1582, %v1845
  %v1847 = vpop.f32.mrf.mxu0
  %v1848 = vadd.f32 %v1584, %v1847
  %1849 = vmatmul.bf16.gmra.mxu0 %v1390
  %v1850 = vpop.f32.mrf.mxu0
  %v1851 = vadd.f32 %v1587, %v1850
  %v1852 = vpop.f32.mrf.mxu0
  %v1853 = vadd.f32 %v1589, %v1852
  %1854 = vmatmul.bf16.gmra.mxu0 %v1393
  %v1855 = vpop.f32.mrf.mxu0
  %v1856 = vadd.f32 %v1592, %v1855
  %v1857 = vpop.f32.mrf.mxu0
  %v1858 = vadd.f32 %v1594, %v1857
  %1859 = vmatmul.bf16.gmra.mxu0 %v1396
  %v1860 = vpop.f32.mrf.mxu0
  %v1861 = vadd.f32 %v1597, %v1860
  %v1862 = vpop.f32.mrf.mxu0
  %v1863 = vadd.f32 %v1599, %v1862
  %1864 = vmatmul.bf16.gmra.mxu0 %v1399
  %v1865 = vpop.f32.mrf.mxu0
  %v1866 = vadd.f32 %v1602, %v1865
  %v1867 = vpop.f32.mrf.mxu0
  %v1868 = vadd.f32 %v1604, %v1867
  %1869 = vmatmul.bf16.gmra.mxu0 %v1402
  %v1870 = vpop.f32.mrf.mxu0
  %v1871 = vadd.f32 %v1607, %v1870
  %v1872 = vpop.f32.mrf.mxu0
  %v1873 = vadd.f32 %v1609, %v1872
  %1874 = vmatmul.bf16.gmra.mxu0 %v1405
  %v1875 = vpop.f32.mrf.mxu0
  %v1876 = vadd.f32 %v1612, %v1875
  %v1877 = vpop.f32.mrf.mxu0
  %v1878 = vadd.f32 %v1614, %v1877
  %1879 = vmatmul.bf16.gmra.mxu0 %v1408
  %v1880 = vpop.f32.mrf.mxu0
  %v1881 = vadd.f32 %v1617, %v1880
  %v1882 = vpop.f32.mrf.mxu0
  %v1883 = vadd.f32 %v1619, %v1882
  %1884 = vmatmul.bf16.gmra.mxu0 %v1411
  %v1885 = vpop.f32.mrf.mxu0
  %v1886 = vadd.f32 %v1622, %v1885
  %v1887 = vpop.f32.mrf.mxu0
  %v1888 = vadd.f32 %v1624, %v1887
  %1889 = vmatmul.bf16.gmra.mxu0 %v1414
  %v1890 = vpop.f32.mrf.mxu0
  %v1891 = vadd.f32 %v1627, %v1890
  %v1892 = vpop.f32.mrf.mxu0
  %v1893 = vadd.f32 %v1629, %v1892
  %1894 = vmatmul.bf16.gmra.mxu0 %v1417
  %v1895 = vpop.f32.mrf.mxu0
  %v1896 = vadd.f32 %v1632, %v1895
  %v1897 = vpop.f32.mrf.mxu0
  %v1898 = vadd.f32 %v1634, %v1897
  %1899 = vmatmul.bf16.gmra.mxu0 %v1420
  %v1900 = vpop.f32.mrf.mxu0
  %v1901 = vadd.f32 %v1637, %v1900
  %v1902 = vpop.f32.mrf.mxu0
  %v1903 = vadd.f32 %v1639, %v1902
  %1904 = vmatmul.bf16.gmra.mxu0 %v1423
  %v1905 = vpop.f32.mrf.mxu0
  %v1906 = vadd.f32 %v1642, %v1905
  %v1907 = vpop.f32.mrf.mxu0
  %v1908 = vadd.f32 %v1644, %v1907
  %1909 = vmatmul.bf16.gmra.mxu0 %v1426
  %v1910 = vpop.f32.mrf.mxu0
  %v1911 = vadd.f32 %v1647, %v1910
  %v1912 = vpop.f32.mrf.mxu0
  %v1913 = vadd.f32 %v1649, %v1912
  %1914 = vmatmul.bf16.gmra.mxu0 %v1429
  %v1915 = vpop.f32.mrf.mxu0
  %v1916 = vadd.f32 %v1652, %v1915
  %v1917 = vpop.f32.mrf.mxu0
  %v1918 = vadd.f32 %v1654, %v1917
  %1919 = vmatmul.bf16.gmra.mxu0 %v1432
  %v1920 = vpop.f32.mrf.mxu0
  %v1921 = vadd.f32 %v1657, %v1920
  %v1922 = vpop.f32.mrf.mxu0
  %v1923 = vadd.f32 %v1659, %v1922
  %1924 = vmatmul.bf16.gmra.mxu0 %v1435
  %v1925 = vpop.f32.mrf.mxu0
  %v1926 = vadd.f32 %v1662, %v1925
  %v1927 = vpop.f32.mrf.mxu0
  %v1928 = vadd.f32 %v1664, %v1927
  %1929 = vmatmul.bf16.gmra.mxu0 %v1438
  %v1930 = vpop.f32.mrf.mxu0
  %v1931 = vadd.f32 %v1667, %v1930
  %v1932 = vpop.f32.mrf.mxu0
  %v1933 = vadd.f32 %v1669, %v1932
  %1934 = vmatmul.bf16.gmra.mxu0 %v1441
  %v1935 = vpop.f32.mrf.mxu0
  %v1936 = vadd.f32 %v1672, %v1935
  %v1937 = vpop.f32.mrf.mxu0
  %v1938 = vadd.f32 %v1674, %v1937
  %1939 = vmatmul.bf16.gmra.mxu0 %v1444
  %v1940 = vpop.f32.mrf.mxu0
  %v1941 = vadd.f32 %v1677, %v1940
  %v1942 = vpop.f32.mrf.mxu0
  %v1943 = vadd.f32 %v1679, %v1942
  %1944 = vmatmul.bf16.gmra.mxu0 %v1447
  %v1945 = vpop.f32.mrf.mxu0
  %v1946 = vadd.f32 %v1682, %v1945
  %v1947 = vpop.f32.mrf.mxu0
  %v1948 = vadd.f32 %v1684, %v1947
  %1949 = vmatmul.bf16.gmra.mxu0 %v1450
  %v1950 = vpop.f32.mrf.mxu0
  %v1951 = vadd.f32 %v1687, %v1950
  %v1952 = vpop.f32.mrf.mxu0
  %v1953 = vadd.f32 %v1689, %v1952
  %1954 = vmatmul.bf16.gmra.mxu0 %v1453
  %v1955 = vpop.f32.mrf.mxu0
  %v1956 = vadd.f32 %v1692, %v1955
  %v1957 = vpop.f32.mrf.mxu0
  %v1958 = vadd.f32 %v1694, %v1957
  %1959 = vmatmul.bf16.gmra.mxu0 %v1456
  %v1960 = vpop.f32.mrf.mxu0
  %v1961 = vadd.f32 %v1697, %v1960
  %v1962 = vpop.f32.mrf.mxu0
  %v1963 = vadd.f32 %v1699, %v1962
  %1964 = vmatmul.bf16.gmra.mxu0 %v1459
  %v1965 = vpop.f32.mrf.mxu0
  %v1966 = vadd.f32 %v1702, %v1965
  %v1967 = vpop.f32.mrf.mxu0
  %v1968 = vadd.f32 %v1704, %v1967
  %1969 = vmatmul.bf16.gmra.mxu0 %v1462
  %v1970 = vpop.f32.mrf.mxu0
  %v1971 = vadd.f32 %v1707, %v1970
  %v1972 = vpop.f32.mrf.mxu0
  %v1973 = vadd.f32 %v1709, %v1972
  %1974 = vmatmul.bf16.gmra.mxu0 %v1465
  %v1975 = vpop.f32.mrf.mxu0
  %v1976 = vadd.f32 %v1712, %v1975
  %v1977 = vpop.f32.mrf.mxu0
  %v1978 = vadd.f32 %v1714, %v1977
  %1979 = vmatmul.bf16.gmra.mxu0 %v1468
  %v1980 = vpop.f32.mrf.mxu0
  %v1981 = vadd.f32 %v1717, %v1980
  %v1982 = vpop.f32.mrf.mxu0
  %v1983 = vadd.f32 %v1719, %v1982
  %1984 = vmatmul.bf16.gmra.mxu0 %v1471
  %v1985 = vpop.f32.mrf.mxu0
  %v1986 = vadd.f32 %v1722, %v1985
  %v1987 = vpop.f32.mrf.mxu0
  %v1988 = vadd.f32 %v1724, %v1987
  %1989 = vmatmul.bf16.gmra.mxu0 %v1474
  %v1990 = vpop.f32.mrf.mxu0
  %v1991 = vadd.f32 %v1727, %v1990
  %v1992 = vpop.f32.mrf.mxu0
  %v1993 = vadd.f32 %v1729, %v1992
  %1994 = vmatmul.bf16.gmra.mxu0 %v1477
  %v1995 = vpop.f32.mrf.mxu0
  %v1996 = vadd.f32 %v1732, %v1995
  %v1997 = vpop.f32.mrf.mxu0
  %v1998 = vadd.f32 %v1734, %v1997
  %1999 = vmatmul.bf16.gmra.mxu0 %v1480
  %v2000 = vpop.f32.mrf.mxu0
  %v2001 = vadd.f32 %v1737, %v2000
  %v2002 = vpop.f32.mrf.mxu0
  %v2003 = vadd.f32 %v1739, %v2002
  %2004 = vmatmul.bf16.gmra.mxu0 %v1483
  %v2005 = vpop.f32.mrf.mxu0
  %v2006 = vadd.f32 %v1742, %v2005
  %v2007 = vpop.f32.mrf.mxu0
  %v2008 = vadd.f32 %v1744, %v2007
  %2009 = vmatmul.bf16.gmra.mxu0 %v1486
  %v2010 = vpop.f32.mrf.mxu0
  %v2011 = vadd.f32 %v1747, %v2010
  %v2012 = vpop.f32.mrf.mxu0
  %v2013 = vadd.f32 %v1749, %v2012
  %2014 = vmatmul.bf16.gmra.mxu0 %v1489
  %v2015 = vpop.f32.mrf.mxu0
  %v2016 = vadd.f32 %v1752, %v2015
  %v2017 = vpop.f32.mrf.mxu0
  %v2018 = vadd.f32 %v1754, %v2017
  %2019 = vmatmul.bf16.gmra.mxu0 %v1492
  %v2020 = vpop.f32.mrf.mxu0
  %v2021 = vadd.f32 %v1757, %v2020
  %v2022 = vpop.f32.mrf.mxu0
  %v2023 = vadd.f32 %v1759, %v2022
  %2024 = vmatmul.bf16.gmra.mxu0 %v1495
  %v2025 = vpop.f32.mrf.mxu0
  %v2026 = vadd.f32 %v1762, %v2025
  %v2027 = vpop.f32.mrf.mxu0
  %v2028 = vadd.f32 %v1764, %v2027
  %2029 = vmatmul.bf16.gmra.mxu0 %v1498
  %v2030 = vpop.f32.mrf.mxu0
  %v2031 = vadd.f32 %v1767, %v2030
  %v2032 = vpop.f32.mrf.mxu0
  %v2033 = vadd.f32 %v1769, %v2032
  %2034 = vdwg.mxu0
  %2035 = vmatpush.bf16.msra.mxu0 %v782
  %2036 = vmatpush.bf16.msra.mxu0 %v780
  %2037 = vmatpush.bf16.msra.mxu0 %v778
  %2038 = vmatpush.bf16.msra.mxu0 %v776
  %2039 = vmatpush.bf16.msra.mxu0 %v774
  %2040 = vmatpush.bf16.msra.mxu0 %v772
  %2041 = vmatpush.bf16.msra.mxu0 %v770
  %2042 = vmatpush.bf16.msra.mxu0 %v768
  %2043 = vmatmul.bf16.gmra.mxu0 %v1193
  %v2044 = vpop.f32.mrf.mxu0
  %v2045 = vadd.f32 0.0, %v2044
  %v2046 = vpop.f32.mrf.mxu0
  %v2047 = vadd.f32 0.0, %v2046
  %2048 = vmatmul.bf16.gmra.mxu0 %v1195
  %v2049 = vpop.f32.mrf.mxu0
  %v2050 = vadd.f32 0.0, %v2049
  %v2051 = vpop.f32.mrf.mxu0
  %v2052 = vadd.f32 0.0, %v2051
  %2053 = vmatmul.bf16.gmra.mxu0 %v1197
  %v2054 = vpop.f32.mrf.mxu0
  %v2055 = vadd.f32 0.0, %v2054
  %v2056 = vpop.f32.mrf.mxu0
  %v2057 = vadd.f32 0.0, %v2056
  %2058 = vmatmul.bf16.gmra.mxu0 %v1199
  %v2059 = vpop.f32.mrf.mxu0
  %v2060 = vadd.f32 0.0, %v2059
  %v2061 = vpop.f32.mrf.mxu0
  %v2062 = vadd.f32 0.0, %v2061
  %2063 = vmatmul.bf16.gmra.mxu0 %v1201
  %v2064 = vpop.f32.mrf.mxu0
  %v2065 = vadd.f32 0.0, %v2064
  %v2066 = vpop.f32.mrf.mxu0
  %v2067 = vadd.f32 0.0, %v2066
  %2068 = vmatmul.bf16.gmra.mxu0 %v1203
  %v2069 = vpop.f32.mrf.mxu0
  %v2070 = vadd.f32 0.0, %v2069
  %v2071 = vpop.f32.mrf.mxu0
  %v2072 = vadd.f32 0.0, %v2071
  %2073 = vmatmul.bf16.gmra.mxu0 %v1205
  %v2074 = vpop.f32.mrf.mxu0
  %v2075 = vadd.f32 0.0, %v2074
  %v2076 = vpop.f32.mrf.mxu0
  %v2077 = vadd.f32 0.0, %v2076
  %2078 = vmatmul.bf16.gmra.mxu0 %v1207
  %v2079 = vpop.f32.mrf.mxu0
  %v2080 = vadd.f32 0.0, %v2079
  %v2081 = vpop.f32.mrf.mxu0
  %v2082 = vadd.f32 0.0, %v2081
  %2083 = vmatmul.bf16.gmra.mxu0 %v1209
  %v2084 = vpop.f32.mrf.mxu0
  %v2085 = vadd.f32 0.0, %v2084
  %v2086 = vpop.f32.mrf.mxu0
  %v2087 = vadd.f32 0.0, %v2086
  %2088 = vmatmul.bf16.gmra.mxu0 %v1211
  %v2089 = vpop.f32.mrf.mxu0
  %v2090 = vadd.f32 0.0, %v2089
  %v2091 = vpop.f32.mrf.mxu0
  %v2092 = vadd.f32 0.0, %v2091
  %2093 = vmatmul.bf16.gmra.mxu0 %v1213
  %v2094 = vpop.f32.mrf.mxu0
  %v2095 = vadd.f32 0.0, %v2094
  %v2096 = vpop.f32.mrf.mxu0
  %v2097 = vadd.f32 0.0, %v2096
  %2098 = vmatmul.bf16.gmra.mxu0 %v1215
  %v2099 = vpop.f32.mrf.mxu0
  %v2100 = vadd.f32 0.0, %v2099
  %v2101 = vpop.f32.mrf.mxu0
  %v2102 = vadd.f32 0.0, %v2101
  %2103 = vmatmul.bf16.gmra.mxu0 %v1217
  %v2104 = vpop.f32.mrf.mxu0
  %v2105 = vadd.f32 0.0, %v2104
  %v2106 = vpop.f32.mrf.mxu0
  %v2107 = vadd.f32 0.0, %v2106
  %2108 = vmatmul.bf16.gmra.mxu0 %v1219
  %v2109 = vpop.f32.mrf.mxu0
  %v2110 = vadd.f32 0.0, %v2109
  %v2111 = vpop.f32.mrf.mxu0
  %v2112 = vadd.f32 0.0, %v2111
  %2113 = vmatmul.bf16.gmra.mxu0 %v1221
  %v2114 = vpop.f32.mrf.mxu0
  %v2115 = vadd.f32 0.0, %v2114
  %v2116 = vpop.f32.mrf.mxu0
  %v2117 = vadd.f32 0.0, %v2116
  %2118 = vmatmul.bf16.gmra.mxu0 %v1223
  %v2119 = vpop.f32.mrf.mxu0
  %v2120 = vadd.f32 0.0, %v2119
  %v2121 = vpop.f32.mrf.mxu0
  %v2122 = vadd.f32 0.0, %v2121
  %2123 = vmatmul.bf16.gmra.mxu0 %v1225
  %v2124 = vpop.f32.mrf.mxu0
  %v2125 = vadd.f32 0.0, %v2124
  %v2126 = vpop.f32.mrf.mxu0
  %v2127 = vadd.f32 0.0, %v2126
  %2128 = vmatmul.bf16.gmra.mxu0 %v1227
  %v2129 = vpop.f32.mrf.mxu0
  %v2130 = vadd.f32 0.0, %v2129
  %v2131 = vpop.f32.mrf.mxu0
  %v2132 = vadd.f32 0.0, %v2131
  %2133 = vmatmul.bf16.gmra.mxu0 %v1229
  %v2134 = vpop.f32.mrf.mxu0
  %v2135 = vadd.f32 0.0, %v2134
  %v2136 = vpop.f32.mrf.mxu0
  %v2137 = vadd.f32 0.0, %v2136
  %2138 = vmatmul.bf16.gmra.mxu0 %v1231
  %v2139 = vpop.f32.mrf.mxu0
  %v2140 = vadd.f32 0.0, %v2139
  %v2141 = vpop.f32.mrf.mxu0
  %v2142 = vadd.f32 0.0, %v2141
  %2143 = vmatmul.bf16.gmra.mxu0 %v1233
  %v2144 = vpop.f32.mrf.mxu0
  %v2145 = vadd.f32 0.0, %v2144
  %v2146 = vpop.f32.mrf.mxu0
  %v2147 = vadd.f32 0.0, %v2146
  %2148 = vmatmul.bf16.gmra.mxu0 %v1235
  %v2149 = vpop.f32.mrf.mxu0
  %v2150 = vadd.f32 0.0, %v2149
  %v2151 = vpop.f32.mrf.mxu0
  %v2152 = vadd.f32 0.0, %v2151
  %2153 = vmatmul.bf16.gmra.mxu0 %v1237
  %v2154 = vpop.f32.mrf.mxu0
  %v2155 = vadd.f32 0.0, %v2154
  %v2156 = vpop.f32.mrf.mxu0
  %v2157 = vadd.f32 0.0, %v2156
  %2158 = vmatmul.bf16.gmra.mxu0 %v1239
  %v2159 = vpop.f32.mrf.mxu0
  %v2160 = vadd.f32 0.0, %v2159
  %v2161 = vpop.f32.mrf.mxu0
  %v2162 = vadd.f32 0.0, %v2161
  %2163 = vmatmul.bf16.gmra.mxu0 %v1241
  %v2164 = vpop.f32.mrf.mxu0
  %v2165 = vadd.f32 0.0, %v2164
  %v2166 = vpop.f32.mrf.mxu0
  %v2167 = vadd.f32 0.0, %v2166
  %2168 = vmatmul.bf16.gmra.mxu0 %v1243
  %v2169 = vpop.f32.mrf.mxu0
  %v2170 = vadd.f32 0.0, %v2169
  %v2171 = vpop.f32.mrf.mxu0
  %v2172 = vadd.f32 0.0, %v2171
  %2173 = vmatmul.bf16.gmra.mxu0 %v1245
  %v2174 = vpop.f32.mrf.mxu0
  %v2175 = vadd.f32 0.0, %v2174
  %v2176 = vpop.f32.mrf.mxu0
  %v2177 = vadd.f32 0.0, %v2176
  %2178 = vmatmul.bf16.gmra.mxu0 %v1247
  %v2179 = vpop.f32.mrf.mxu0
  %v2180 = vadd.f32 0.0, %v2179
  %v2181 = vpop.f32.mrf.mxu0
  %v2182 = vadd.f32 0.0, %v2181
  %2183 = vmatmul.bf16.gmra.mxu0 %v1249
  %v2184 = vpop.f32.mrf.mxu0
  %v2185 = vadd.f32 0.0, %v2184
  %v2186 = vpop.f32.mrf.mxu0
  %v2187 = vadd.f32 0.0, %v2186
  %2188 = vmatmul.bf16.gmra.mxu0 %v1251
  %v2189 = vpop.f32.mrf.mxu0
  %v2190 = vadd.f32 0.0, %v2189
  %v2191 = vpop.f32.mrf.mxu0
  %v2192 = vadd.f32 0.0, %v2191
  %2193 = vmatmul.bf16.gmra.mxu0 %v1253
  %v2194 = vpop.f32.mrf.mxu0
  %v2195 = vadd.f32 0.0, %v2194
  %v2196 = vpop.f32.mrf.mxu0
  %v2197 = vadd.f32 0.0, %v2196
  %2198 = vmatmul.bf16.gmra.mxu0 %v1255
  %v2199 = vpop.f32.mrf.mxu0
  %v2200 = vadd.f32 0.0, %v2199
  %v2201 = vpop.f32.mrf.mxu0
  %v2202 = vadd.f32 0.0, %v2201
  %2203 = vmatmul.bf16.gmra.mxu0 %v1257
  %v2204 = vpop.f32.mrf.mxu0
  %v2205 = vadd.f32 0.0, %v2204
  %v2206 = vpop.f32.mrf.mxu0
  %v2207 = vadd.f32 0.0, %v2206
  %2208 = vmatmul.bf16.gmra.mxu0 %v1259
  %v2209 = vpop.f32.mrf.mxu0
  %v2210 = vadd.f32 0.0, %v2209
  %v2211 = vpop.f32.mrf.mxu0
  %v2212 = vadd.f32 0.0, %v2211
  %2213 = vmatmul.bf16.gmra.mxu0 %v1261
  %v2214 = vpop.f32.mrf.mxu0
  %v2215 = vadd.f32 0.0, %v2214
  %v2216 = vpop.f32.mrf.mxu0
  %v2217 = vadd.f32 0.0, %v2216
  %2218 = vmatmul.bf16.gmra.mxu0 %v1263
  %v2219 = vpop.f32.mrf.mxu0
  %v2220 = vadd.f32 0.0, %v2219
  %v2221 = vpop.f32.mrf.mxu0
  %v2222 = vadd.f32 0.0, %v2221
  %2223 = vmatmul.bf16.gmra.mxu0 %v1265
  %v2224 = vpop.f32.mrf.mxu0
  %v2225 = vadd.f32 0.0, %v2224
  %v2226 = vpop.f32.mrf.mxu0
  %v2227 = vadd.f32 0.0, %v2226
  %2228 = vmatmul.bf16.gmra.mxu0 %v1267
  %v2229 = vpop.f32.mrf.mxu0
  %v2230 = vadd.f32 0.0, %v2229
  %v2231 = vpop.f32.mrf.mxu0
  %v2232 = vadd.f32 0.0, %v2231
  %2233 = vmatmul.bf16.gmra.mxu0 %v1269
  %v2234 = vpop.f32.mrf.mxu0
  %v2235 = vadd.f32 0.0, %v2234
  %v2236 = vpop.f32.mrf.mxu0
  %v2237 = vadd.f32 0.0, %v2236
  %2238 = vmatmul.bf16.gmra.mxu0 %v1271
  %v2239 = vpop.f32.mrf.mxu0
  %v2240 = vadd.f32 0.0, %v2239
  %v2241 = vpop.f32.mrf.mxu0
  %v2242 = vadd.f32 0.0, %v2241
  %2243 = vmatmul.bf16.gmra.mxu0 %v1273
  %v2244 = vpop.f32.mrf.mxu0
  %v2245 = vadd.f32 0.0, %v2244
  %v2246 = vpop.f32.mrf.mxu0
  %v2247 = vadd.f32 0.0, %v2246
  %2248 = vmatmul.bf16.gmra.mxu0 %v1275
  %v2249 = vpop.f32.mrf.mxu0
  %v2250 = vadd.f32 0.0, %v2249
  %v2251 = vpop.f32.mrf.mxu0
  %v2252 = vadd.f32 0.0, %v2251
  %2253 = vmatmul.bf16.gmra.mxu0 %v1277
  %v2254 = vpop.f32.mrf.mxu0
  %v2255 = vadd.f32 0.0, %v2254
  %v2256 = vpop.f32.mrf.mxu0
  %v2257 = vadd.f32 0.0, %v2256
  %2258 = vmatmul.bf16.gmra.mxu0 %v1279
  %v2259 = vpop.f32.mrf.mxu0
  %v2260 = vadd.f32 0.0, %v2259
  %v2261 = vpop.f32.mrf.mxu0
  %v2262 = vadd.f32 0.0, %v2261
  %2263 = vmatmul.bf16.gmra.mxu0 %v1281
  %v2264 = vpop.f32.mrf.mxu0
  %v2265 = vadd.f32 0.0, %v2264
  %v2266 = vpop.f32.mrf.mxu0
  %v2267 = vadd.f32 0.0, %v2266
  %2268 = vmatmul.bf16.gmra.mxu0 %v1283
  %v2269 = vpop.f32.mrf.mxu0
  %v2270 = vadd.f32 0.0, %v2269
  %v2271 = vpop.f32.mrf.mxu0
  %v2272 = vadd.f32 0.0, %v2271
  %2273 = vmatmul.bf16.gmra.mxu0 %v1285
  %v2274 = vpop.f32.mrf.mxu0
  %v2275 = vadd.f32 0.0, %v2274
  %v2276 = vpop.f32.mrf.mxu0
  %v2277 = vadd.f32 0.0, %v2276
  %2278 = vmatmul.bf16.gmra.mxu0 %v1287
  %v2279 = vpop.f32.mrf.mxu0
  %v2280 = vadd.f32 0.0, %v2279
  %v2281 = vpop.f32.mrf.mxu0
  %v2282 = vadd.f32 0.0, %v2281
  %2283 = vmatmul.bf16.gmra.mxu0 %v1289
  %v2284 = vpop.f32.mrf.mxu0
  %v2285 = vadd.f32 0.0, %v2284
  %v2286 = vpop.f32.mrf.mxu0
  %v2287 = vadd.f32 0.0, %v2286
  %2288 = vmatmul.bf16.gmra.mxu0 %v1291
  %v2289 = vpop.f32.mrf.mxu0
  %v2290 = vadd.f32 0.0, %v2289
  %v2291 = vpop.f32.mrf.mxu0
  %v2292 = vadd.f32 0.0, %v2291
  %2293 = vmatmul.bf16.gmra.mxu0 %v1293
  %v2294 = vpop.f32.mrf.mxu0
  %v2295 = vadd.f32 0.0, %v2294
  %v2296 = vpop.f32.mrf.mxu0
  %v2297 = vadd.f32 0.0, %v2296
  %2298 = vdwg.mxu0
  %2299 = vmatpush.bf16.msra.mxu0 0
  %2300 = vmatpush.bf16.msra.mxu0 0
  %2301 = vmatpush.bf16.msra.mxu0 0
  %2302 = vmatpush.bf16.msra.mxu0 0
  %2303 = vmatpush.bf16.msra.mxu0 0
  %2304 = vmatpush.bf16.msra.mxu0 0
  %2305 = vmatpush.bf16.msra.mxu0 0
  %2306 = vmatpush.bf16.msra.mxu0 %v1505
  %2307 = vmatmul.bf16.gmra.mxu0 %v1348
  %v2308 = vpop.f32.mrf.mxu0
  %v2309 = vadd.f32 %v2045, %v2308
  %v2310 = vpop.f32.mrf.mxu0
  %v2311 = vadd.f32 %v2047, %v2310
  %2312 = vmatmul.bf16.gmra.mxu0 %v1351
  %v2313 = vpop.f32.mrf.mxu0
  %v2314 = vadd.f32 %v2050, %v2313
  %v2315 = vpop.f32.mrf.mxu0
  %v2316 = vadd.f32 %v2052, %v2315
  %2317 = vmatmul.bf16.gmra.mxu0 %v1354
  %v2318 = vpop.f32.mrf.mxu0
  %v2319 = vadd.f32 %v2055, %v2318
  %v2320 = vpop.f32.mrf.mxu0
  %v2321 = vadd.f32 %v2057, %v2320
  %2322 = vmatmul.bf16.gmra.mxu0 %v1357
  %v2323 = vpop.f32.mrf.mxu0
  %v2324 = vadd.f32 %v2060, %v2323
  %v2325 = vpop.f32.mrf.mxu0
  %v2326 = vadd.f32 %v2062, %v2325
  %2327 = vmatmul.bf16.gmra.mxu0 %v1360
  %v2328 = vpop.f32.mrf.mxu0
  %v2329 = vadd.f32 %v2065, %v2328
  %v2330 = vpop.f32.mrf.mxu0
  %v2331 = vadd.f32 %v2067, %v2330
  %2332 = vmatmul.bf16.gmra.mxu0 %v1363
  %v2333 = vpop.f32.mrf.mxu0
  %v2334 = vadd.f32 %v2070, %v2333
  %v2335 = vpop.f32.mrf.mxu0
  %v2336 = vadd.f32 %v2072, %v2335
  %2337 = vmatmul.bf16.gmra.mxu0 %v1366
  %v2338 = vpop.f32.mrf.mxu0
  %v2339 = vadd.f32 %v2075, %v2338
  %v2340 = vpop.f32.mrf.mxu0
  %v2341 = vadd.f32 %v2077, %v2340
  %2342 = vmatmul.bf16.gmra.mxu0 %v1369
  %v2343 = vpop.f32.mrf.mxu0
  %v2344 = vadd.f32 %v2080, %v2343
  %v2345 = vpop.f32.mrf.mxu0
  %v2346 = vadd.f32 %v2082, %v2345
  %2347 = vmatmul.bf16.gmra.mxu0 %v1372
  %v2348 = vpop.f32.mrf.mxu0
  %v2349 = vadd.f32 %v2085, %v2348
  %v2350 = vpop.f32.mrf.mxu0
  %v2351 = vadd.f32 %v2087, %v2350
  %2352 = vmatmul.bf16.gmra.mxu0 %v1375
  %v2353 = vpop.f32.mrf.mxu0
  %v2354 = vadd.f32 %v2090, %v2353
  %v2355 = vpop.f32.mrf.mxu0
  %v2356 = vadd.f32 %v2092, %v2355
  %2357 = vmatmul.bf16.gmra.mxu0 %v1378
  %v2358 = vpop.f32.mrf.mxu0
  %v2359 = vadd.f32 %v2095, %v2358
  %v2360 = vpop.f32.mrf.mxu0
  %v2361 = vadd.f32 %v2097, %v2360
  %2362 = vmatmul.bf16.gmra.mxu0 %v1381
  %v2363 = vpop.f32.mrf.mxu0
  %v2364 = vadd.f32 %v2100, %v2363
  %v2365 = vpop.f32.mrf.mxu0
  %v2366 = vadd.f32 %v2102, %v2365
  %2367 = vmatmul.bf16.gmra.mxu0 %v1384
  %v2368 = vpop.f32.mrf.mxu0
  %v2369 = vadd.f32 %v2105, %v2368
  %v2370 = vpop.f32.mrf.mxu0
  %v2371 = vadd.f32 %v2107, %v2370
  %2372 = vmatmul.bf16.gmra.mxu0 %v1387
  %v2373 = vpop.f32.mrf.mxu0
  %v2374 = vadd.f32 %v2110, %v2373
  %v2375 = vpop.f32.mrf.mxu0
  %v2376 = vadd.f32 %v2112, %v2375
  %2377 = vmatmul.bf16.gmra.mxu0 %v1390
  %v2378 = vpop.f32.mrf.mxu0
  %v2379 = vadd.f32 %v2115, %v2378
  %v2380 = vpop.f32.mrf.mxu0
  %v2381 = vadd.f32 %v2117, %v2380
  %2382 = vmatmul.bf16.gmra.mxu0 %v1393
  %v2383 = vpop.f32.mrf.mxu0
  %v2384 = vadd.f32 %v2120, %v2383
  %v2385 = vpop.f32.mrf.mxu0
  %v2386 = vadd.f32 %v2122, %v2385
  %2387 = vmatmul.bf16.gmra.mxu0 %v1396
  %v2388 = vpop.f32.mrf.mxu0
  %v2389 = vadd.f32 %v2125, %v2388
  %v2390 = vpop.f32.mrf.mxu0
  %v2391 = vadd.f32 %v2127, %v2390
  %2392 = vmatmul.bf16.gmra.mxu0 %v1399
  %v2393 = vpop.f32.mrf.mxu0
  %v2394 = vadd.f32 %v2130, %v2393
  %v2395 = vpop.f32.mrf.mxu0
  %v2396 = vadd.f32 %v2132, %v2395
  %2397 = vmatmul.bf16.gmra.mxu0 %v1402
  %v2398 = vpop.f32.mrf.mxu0
  %v2399 = vadd.f32 %v2135, %v2398
  %v2400 = vpop.f32.mrf.mxu0
  %v2401 = vadd.f32 %v2137, %v2400
  %2402 = vmatmul.bf16.gmra.mxu0 %v1405
  %v2403 = vpop.f32.mrf.mxu0
  %v2404 = vadd.f32 %v2140, %v2403
  %v2405 = vpop.f32.mrf.mxu0
  %v2406 = vadd.f32 %v2142, %v2405
  %2407 = vmatmul.bf16.gmra.mxu0 %v1408
  %v2408 = vpop.f32.mrf.mxu0
  %v2409 = vadd.f32 %v2145, %v2408
  %v2410 = vpop.f32.mrf.mxu0
  %v2411 = vadd.f32 %v2147, %v2410
  %2412 = vmatmul.bf16.gmra.mxu0 %v1411
  %v2413 = vpop.f32.mrf.mxu0
  %v2414 = vadd.f32 %v2150, %v2413
  %v2415 = vpop.f32.mrf.mxu0
  %v2416 = vadd.f32 %v2152, %v2415
  %2417 = vmatmul.bf16.gmra.mxu0 %v1414
  %v2418 = vpop.f32.mrf.mxu0
  %v2419 = vadd.f32 %v2155, %v2418
  %v2420 = vpop.f32.mrf.mxu0
  %v2421 = vadd.f32 %v2157, %v2420
  %2422 = vmatmul.bf16.gmra.mxu0 %v1417
  %v2423 = vpop.f32.mrf.mxu0
  %v2424 = vadd.f32 %v2160, %v2423
  %v2425 = vpop.f32.mrf.mxu0
  %v2426 = vadd.f32 %v2162, %v2425
  %2427 = vmatmul.bf16.gmra.mxu0 %v1420
  %v2428 = vpop.f32.mrf.mxu0
  %v2429 = vadd.f32 %v2165, %v2428
  %v2430 = vpop.f32.mrf.mxu0
  %v2431 = vadd.f32 %v2167, %v2430
  %2432 = vmatmul.bf16.gmra.mxu0 %v1423
  %v2433 = vpop.f32.mrf.mxu0
  %v2434 = vadd.f32 %v2170, %v2433
  %v2435 = vpop.f32.mrf.mxu0
  %v2436 = vadd.f32 %v2172, %v2435
  %2437 = vmatmul.bf16.gmra.mxu0 %v1426
  %v2438 = vpop.f32.mrf.mxu0
  %v2439 = vadd.f32 %v2175, %v2438
  %v2440 = vpop.f32.mrf.mxu0
  %v2441 = vadd.f32 %v2177, %v2440
  %2442 = vmatmul.bf16.gmra.mxu0 %v1429
  %v2443 = vpop.f32.mrf.mxu0
  %v2444 = vadd.f32 %v2180, %v2443
  %v2445 = vpop.f32.mrf.mxu0
  %v2446 = vadd.f32 %v2182, %v2445
  %2447 = vmatmul.bf16.gmra.mxu0 %v1432
  %v2448 = vpop.f32.mrf.mxu0
  %v2449 = vadd.f32 %v2185, %v2448
  %v2450 = vpop.f32.mrf.mxu0
  %v2451 = vadd.f32 %v2187, %v2450
  %2452 = vmatmul.bf16.gmra.mxu0 %v1435
  %v2453 = vpop.f32.mrf.mxu0
  %v2454 = vadd.f32 %v2190, %v2453
  %v2455 = vpop.f32.mrf.mxu0
  %v2456 = vadd.f32 %v2192, %v2455
  %2457 = vmatmul.bf16.gmra.mxu0 %v1438
  %v2458 = vpop.f32.mrf.mxu0
  %v2459 = vadd.f32 %v2195, %v2458
  %v2460 = vpop.f32.mrf.mxu0
  %v2461 = vadd.f32 %v2197, %v2460
  %2462 = vmatmul.bf16.gmra.mxu0 %v1441
  %v2463 = vpop.f32.mrf.mxu0
  %v2464 = vadd.f32 %v2200, %v2463
  %v2465 = vpop.f32.mrf.mxu0
  %v2466 = vadd.f32 %v2202, %v2465
  %2467 = vmatmul.bf16.gmra.mxu0 %v1444
  %v2468 = vpop.f32.mrf.mxu0
  %v2469 = vadd.f32 %v2205, %v2468
  %v2470 = vpop.f32.mrf.mxu0
  %v2471 = vadd.f32 %v2207, %v2470
  %2472 = vmatmul.bf16.gmra.mxu0 %v1447
  %v2473 = vpop.f32.mrf.mxu0
  %v2474 = vadd.f32 %v2210, %v2473
  %v2475 = vpop.f32.mrf.mxu0
  %v2476 = vadd.f32 %v2212, %v2475
  %2477 = vmatmul.bf16.gmra.mxu0 %v1450
  %v2478 = vpop.f32.mrf.mxu0
  %v2479 = vadd.f32 %v2215, %v2478
  %v2480 = vpop.f32.mrf.mxu0
  %v2481 = vadd.f32 %v2217, %v2480
  %2482 = vmatmul.bf16.gmra.mxu0 %v1453
  %v2483 = vpop.f32.mrf.mxu0
  %v2484 = vadd.f32 %v2220, %v2483
  %v2485 = vpop.f32.mrf.mxu0
  %v2486 = vadd.f32 %v2222, %v2485
  %2487 = vmatmul.bf16.gmra.mxu0 %v1456
  %v2488 = vpop.f32.mrf.mxu0
  %v2489 = vadd.f32 %v2225, %v2488
  %v2490 = vpop.f32.mrf.mxu0
  %v2491 = vadd.f32 %v2227, %v2490
  %2492 = vmatmul.bf16.gmra.mxu0 %v1459
  %v2493 = vpop.f32.mrf.mxu0
  %v2494 = vadd.f32 %v2230, %v2493
  %v2495 = vpop.f32.mrf.mxu0
  %v2496 = vadd.f32 %v2232, %v2495
  %2497 = vmatmul.bf16.gmra.mxu0 %v1462
  %v2498 = vpop.f32.mrf.mxu0
  %v2499 = vadd.f32 %v2235, %v2498
  %v2500 = vpop.f32.mrf.mxu0
  %v2501 = vadd.f32 %v2237, %v2500
  %2502 = vmatmul.bf16.gmra.mxu0 %v1465
  %v2503 = vpop.f32.mrf.mxu0
  %v2504 = vadd.f32 %v2240, %v2503
  %v2505 = vpop.f32.mrf.mxu0
  %v2506 = vadd.f32 %v2242, %v2505
  %2507 = vmatmul.bf16.gmra.mxu0 %v1468
  %v2508 = vpop.f32.mrf.mxu0
  %v2509 = vadd.f32 %v2245, %v2508
  %v2510 = vpop.f32.mrf.mxu0
  %v2511 = vadd.f32 %v2247, %v2510
  %2512 = vmatmul.bf16.gmra.mxu0 %v1471
  %v2513 = vpop.f32.mrf.mxu0
  %v2514 = vadd.f32 %v2250, %v2513
  %v2515 = vpop.f32.mrf.mxu0
  %v2516 = vadd.f32 %v2252, %v2515
  %2517 = vmatmul.bf16.gmra.mxu0 %v1474
  %v2518 = vpop.f32.mrf.mxu0
  %v2519 = vadd.f32 %v2255, %v2518
  %v2520 = vpop.f32.mrf.mxu0
  %v2521 = vadd.f32 %v2257, %v2520
  %2522 = vmatmul.bf16.gmra.mxu0 %v1477
  %v2523 = vpop.f32.mrf.mxu0
  %v2524 = vadd.f32 %v2260, %v2523
  %v2525 = vpop.f32.mrf.mxu0
  %v2526 = vadd.f32 %v2262, %v2525
  %2527 = vmatmul.bf16.gmra.mxu0 %v1480
  %v2528 = vpop.f32.mrf.mxu0
  %v2529 = vadd.f32 %v2265, %v2528
  %v2530 = vpop.f32.mrf.mxu0
  %v2531 = vadd.f32 %v2267, %v2530
  %2532 = vmatmul.bf16.gmra.mxu0 %v1483
  %v2533 = vpop.f32.mrf.mxu0
  %v2534 = vadd.f32 %v2270, %v2533
  %v2535 = vpop.f32.mrf.mxu0
  %v2536 = vadd.f32 %v2272, %v2535
  %2537 = vmatmul.bf16.gmra.mxu0 %v1486
  %v2538 = vpop.f32.mrf.mxu0
  %v2539 = vadd.f32 %v2275, %v2538
  %v2540 = vpop.f32.mrf.mxu0
  %v2541 = vadd.f32 %v2277, %v2540
  %2542 = vmatmul.bf16.gmra.mxu0 %v1489
  %v2543 = vpop.f32.mrf.mxu0
  %v2544 = vadd.f32 %v2280, %v2543
  %v2545 = vpop.f32.mrf.mxu0
  %v2546 = vadd.f32 %v2282, %v2545
  %2547 = vmatmul.bf16.gmra.mxu0 %v1492
  %v2548 = vpop.f32.mrf.mxu0
  %v2549 = vadd.f32 %v2285, %v2548
  %v2550 = vpop.f32.mrf.mxu0
  %v2551 = vadd.f32 %v2287, %v2550
  %2552 = vmatmul.bf16.gmra.mxu0 %v1495
  %v2553 = vpop.f32.mrf.mxu0
  %v2554 = vadd.f32 %v2290, %v2553
  %v2555 = vpop.f32.mrf.mxu0
  %v2556 = vadd.f32 %v2292, %v2555
  %2557 = vmatmul.bf16.gmra.mxu0 %v1498
  %v2558 = vpop.f32.mrf.mxu0
  %v2559 = vadd.f32 %v2295, %v2558
  %v2560 = vpop.f32.mrf.mxu0
  %v2561 = vadd.f32 %v2297, %v2560
  %2562 = vdwg.mxu0
  %2563 = vst [vmem:[%s4] sm:$0xff] %v1781
  %2564 = vst.msk [vmem:[%s4 + $0x8] sm:$0xff] %vm52, %v2309
  %2565 = vst [vmem:[%s4 + $0x10] sm:$0xff] %v1783
  %2566 = vst.msk [vmem:[%s4 + $0x18] sm:$0xff] %vm52, %v2311
  %2567 = vst [vmem:[%s4 + $0x20] sm:$0xff] %v1786
  %2568 = vst.msk [vmem:[%s4 + $0x28] sm:$0xff] %vm52, %v2314
  %2569 = vst [vmem:[%s4 + $0x30] sm:$0xff] %v1788
  %2570 = vst.msk [vmem:[%s4 + $0x38] sm:$0xff] %vm52, %v2316
  %2571 = vst [vmem:[%s4 + $0x40] sm:$0xff] %v1791
  %2572 = vst.msk [vmem:[%s4 + $0x48] sm:$0xff] %vm52, %v2319
  %2573 = vst [vmem:[%s4 + $0x50] sm:$0xff] %v1793
  %2574 = vst.msk [vmem:[%s4 + $0x58] sm:$0xff] %vm52, %v2321
  %2575 = vst [vmem:[%s4 + $0x60] sm:$0xff] %v1796
  %2576 = vst.msk [vmem:[%s4 + $0x68] sm:$0xff] %vm52, %v2324
  %2577 = vst [vmem:[%s4 + $0x70] sm:$0xff] %v1798
  %2578 = vst.msk [vmem:[%s4 + $0x78] sm:$0xff] %vm52, %v2326
  %2579 = vst [vmem:[%s4 + $0x80] sm:$0xff] %v1801
  %2580 = vst.msk [vmem:[%s4 + $0x88] sm:$0xff] %vm52, %v2329
  %2581 = vst [vmem:[%s4 + $0x90] sm:$0xff] %v1803
  %2582 = vst.msk [vmem:[%s4 + $0x98] sm:$0xff] %vm52, %v2331
  %2583 = vst [vmem:[%s4 + $0xa0] sm:$0xff] %v1806
  %2584 = vst.msk [vmem:[%s4 + $0xa8] sm:$0xff] %vm52, %v2334
  %2585 = vst [vmem:[%s4 + $0xb0] sm:$0xff] %v1808
  %2586 = vst.msk [vmem:[%s4 + $0xb8] sm:$0xff] %vm52, %v2336
  %2587 = vst [vmem:[%s4 + $0xc0] sm:$0xff] %v1811
  %2588 = vst.msk [vmem:[%s4 + $0xc8] sm:$0xff] %vm52, %v2339
  %2589 = vst [vmem:[%s4 + $0xd0] sm:$0xff] %v1813
  %2590 = vst.msk [vmem:[%s4 + $0xd8] sm:$0xff] %vm52, %v2341
  %2591 = vst [vmem:[%s4 + $0xe0] sm:$0xff] %v1816
  %2592 = vst.msk [vmem:[%s4 + $0xe8] sm:$0xff] %vm52, %v2344
  %2593 = vst [vmem:[%s4 + $0xf0] sm:$0xff] %v1818
  %2594 = vst.msk [vmem:[%s4 + $0xf8] sm:$0xff] %vm52, %v2346
  %2595 = vst [vmem:[%s4 + $0x100] sm:$0xff] %v1821
  %2596 = vst.msk [vmem:[%s4 + $0x108] sm:$0xff] %vm52, %v2349
  %2597 = vst [vmem:[%s4 + $0x110] sm:$0xff] %v1823
  %2598 = vst.msk [vmem:[%s4 + $0x118] sm:$0xff] %vm52, %v2351
  %2599 = vst [vmem:[%s4 + $0x120] sm:$0xff] %v1826
  %2600 = vst.msk [vmem:[%s4 + $0x128] sm:$0xff] %vm52, %v2354
  %2601 = vst [vmem:[%s4 + $0x130] sm:$0xff] %v1828
  %2602 = vst.msk [vmem:[%s4 + $0x138] sm:$0xff] %vm52, %v2356
  %2603 = vst [vmem:[%s4 + $0x140] sm:$0xff] %v1831
  %2604 = vst.msk [vmem:[%s4 + $0x148] sm:$0xff] %vm52, %v2359
  %2605 = vst [vmem:[%s4 + $0x150] sm:$0xff] %v1833
  %2606 = vst.msk [vmem:[%s4 + $0x158] sm:$0xff] %vm52, %v2361
  %2607 = vst [vmem:[%s4 + $0x160] sm:$0xff] %v1836
  %2608 = vst.msk [vmem:[%s4 + $0x168] sm:$0xff] %vm52, %v2364
  %2609 = vst [vmem:[%s4 + $0x170] sm:$0xff] %v1838
  %2610 = vst.msk [vmem:[%s4 + $0x178] sm:$0xff] %vm52, %v2366
  %2611 = vst [vmem:[%s4 + $0x180] sm:$0xff] %v1841
  %2612 = vst.msk [vmem:[%s4 + $0x188] sm:$0xff] %vm52, %v2369
  %2613 = vst [vmem:[%s4 + $0x190] sm:$0xff] %v1843
  %2614 = vst.msk [vmem:[%s4 + $0x198] sm:$0xff] %vm52, %v2371
  %2615 = vst [vmem:[%s4 + $0x1a0] sm:$0xff] %v1846
  %2616 = vst.msk [vmem:[%s4 + $0x1a8] sm:$0xff] %vm52, %v2374
  %2617 = vst [vmem:[%s4 + $0x1b0] sm:$0xff] %v1848
  %2618 = vst.msk [vmem:[%s4 + $0x1b8] sm:$0xff] %vm52, %v2376
  %2619 = vst [vmem:[%s4 + $0x1c0] sm:$0xff] %v1851
  %2620 = vst.msk [vmem:[%s4 + $0x1c8] sm:$0xff] %vm52, %v2379
  %2621 = vst [vmem:[%s4 + $0x1d0] sm:$0xff] %v1853
  %2622 = vst.msk [vmem:[%s4 + $0x1d8] sm:$0xff] %vm52, %v2381
  %2623 = vst [vmem:[%s4 + $0x1e0] sm:$0xff] %v1856
  %2624 = vst.msk [vmem:[%s4 + $0x1e8] sm:$0xff] %vm52, %v2384
  %2625 = vst [vmem:[%s4 + $0x1f0] sm:$0xff] %v1858
  %2626 = vst.msk [vmem:[%s4 + $0x1f8] sm:$0xff] %vm52, %v2386
  %2627 = vst [vmem:[%s4 + $0x200] sm:$0xff] %v1861
  %2628 = vst.msk [vmem:[%s4 + $0x208] sm:$0xff] %vm52, %v2389
  %2629 = vst [vmem:[%s4 + $0x210] sm:$0xff] %v1863
  %2630 = vst.msk [vmem:[%s4 + $0x218] sm:$0xff] %vm52, %v2391
  %2631 = vst [vmem:[%s4 + $0x220] sm:$0xff] %v1866
  %2632 = vst.msk [vmem:[%s4 + $0x228] sm:$0xff] %vm52, %v2394
  %2633 = vst [vmem:[%s4 + $0x230] sm:$0xff] %v1868
  %2634 = vst.msk [vmem:[%s4 + $0x238] sm:$0xff] %vm52, %v2396
  %2635 = vst [vmem:[%s4 + $0x240] sm:$0xff] %v1871
  %2636 = vst.msk [vmem:[%s4 + $0x248] sm:$0xff] %vm52, %v2399
  %2637 = vst [vmem:[%s4 + $0x250] sm:$0xff] %v1873
  %2638 = vst.msk [vmem:[%s4 + $0x258] sm:$0xff] %vm52, %v2401
  %2639 = vst [vmem:[%s4 + $0x260] sm:$0xff] %v1876
  %2640 = vst.msk [vmem:[%s4 + $0x268] sm:$0xff] %vm52, %v2404
  %2641 = vst [vmem:[%s4 + $0x270] sm:$0xff] %v1878
  %2642 = vst.msk [vmem:[%s4 + $0x278] sm:$0xff] %vm52, %v2406
  %2643 = vst [vmem:[%s4 + $0x280] sm:$0xff] %v1881
  %2644 = vst.msk [vmem:[%s4 + $0x288] sm:$0xff] %vm52, %v2409
  %2645 = vst [vmem:[%s4 + $0x290] sm:$0xff] %v1883
  %2646 = vst.msk [vmem:[%s4 + $0x298] sm:$0xff] %vm52, %v2411
  %2647 = vst [vmem:[%s4 + $0x2a0] sm:$0xff] %v1886
  %2648 = vst.msk [vmem:[%s4 + $0x2a8] sm:$0xff] %vm52, %v2414
  %2649 = vst [vmem:[%s4 + $0x2b0] sm:$0xff] %v1888
  %2650 = vst.msk [vmem:[%s4 + $0x2b8] sm:$0xff] %vm52, %v2416
  %2651 = vst [vmem:[%s4 + $0x2c0] sm:$0xff] %v1891
  %2652 = vst.msk [vmem:[%s4 + $0x2c8] sm:$0xff] %vm52, %v2419
  %2653 = vst [vmem:[%s4 + $0x2d0] sm:$0xff] %v1893
  %2654 = vst.msk [vmem:[%s4 + $0x2d8] sm:$0xff] %vm52, %v2421
  %2655 = vst [vmem:[%s4 + $0x2e0] sm:$0xff] %v1896
  %2656 = vst.msk [vmem:[%s4 + $0x2e8] sm:$0xff] %vm52, %v2424
  %2657 = vst [vmem:[%s4 + $0x2f0] sm:$0xff] %v1898
  %2658 = vst.msk [vmem:[%s4 + $0x2f8] sm:$0xff] %vm52, %v2426
  %2659 = vst [vmem:[%s4 + $0x300] sm:$0xff] %v1901
  %2660 = vst.msk [vmem:[%s4 + $0x308] sm:$0xff] %vm52, %v2429
  %2661 = vst [vmem:[%s4 + $0x310] sm:$0xff] %v1903
  %2662 = vst.msk [vmem:[%s4 + $0x318] sm:$0xff] %vm52, %v2431
  %2663 = vst [vmem:[%s4 + $0x320] sm:$0xff] %v1906
  %2664 = vst.msk [vmem:[%s4 + $0x328] sm:$0xff] %vm52, %v2434
  %2665 = vst [vmem:[%s4 + $0x330] sm:$0xff] %v1908
  %2666 = vst.msk [vmem:[%s4 + $0x338] sm:$0xff] %vm52, %v2436
  %2667 = vst [vmem:[%s4 + $0x340] sm:$0xff] %v1911
  %2668 = vst.msk [vmem:[%s4 + $0x348] sm:$0xff] %vm52, %v2439
  %2669 = vst [vmem:[%s4 + $0x350] sm:$0xff] %v1913
  %2670 = vst.msk [vmem:[%s4 + $0x358] sm:$0xff] %vm52, %v2441
  %2671 = vst [vmem:[%s4 + $0x360] sm:$0xff] %v1916
  %2672 = vst.msk [vmem:[%s4 + $0x368] sm:$0xff] %vm52, %v2444
  %2673 = vst [vmem:[%s4 + $0x370] sm:$0xff] %v1918
  %2674 = vst.msk [vmem:[%s4 + $0x378] sm:$0xff] %vm52, %v2446
  %2675 = vst [vmem:[%s4 + $0x380] sm:$0xff] %v1921
  %2676 = vst.msk [vmem:[%s4 + $0x388] sm:$0xff] %vm52, %v2449
  %2677 = vst [vmem:[%s4 + $0x390] sm:$0xff] %v1923
  %2678 = vst.msk [vmem:[%s4 + $0x398] sm:$0xff] %vm52, %v2451
  %2679 = vst [vmem:[%s4 + $0x3a0] sm:$0xff] %v1926
  %2680 = vst.msk [vmem:[%s4 + $0x3a8] sm:$0xff] %vm52, %v2454
  %2681 = vst [vmem:[%s4 + $0x3b0] sm:$0xff] %v1928
  %2682 = vst.msk [vmem:[%s4 + $0x3b8] sm:$0xff] %vm52, %v2456
  %2683 = vst [vmem:[%s4 + $0x3c0] sm:$0xff] %v1931
  %2684 = vst.msk [vmem:[%s4 + $0x3c8] sm:$0xff] %vm52, %v2459
  %2685 = vst [vmem:[%s4 + $0x3d0] sm:$0xff] %v1933
  %2686 = vst.msk [vmem:[%s4 + $0x3d8] sm:$0xff] %vm52, %v2461
  %2687 = vst [vmem:[%s4 + $0x3e0] sm:$0xff] %v1936
  %2688 = vst.msk [vmem:[%s4 + $0x3e8] sm:$0xff] %vm52, %v2464
  %2689 = vst [vmem:[%s4 + $0x3f0] sm:$0xff] %v1938
  %2690 = vst.msk [vmem:[%s4 + $0x3f8] sm:$0xff] %vm52, %v2466
  %2691 = vst [vmem:[%s4 + $0x400] sm:$0xff] %v1941
  %2692 = vst.msk [vmem:[%s4 + $0x408] sm:$0xff] %vm52, %v2469
  %2693 = vst [vmem:[%s4 + $0x410] sm:$0xff] %v1943
  %2694 = vst.msk [vmem:[%s4 + $0x418] sm:$0xff] %vm52, %v2471
  %2695 = vst [vmem:[%s4 + $0x420] sm:$0xff] %v1946
  %2696 = vst.msk [vmem:[%s4 + $0x428] sm:$0xff] %vm52, %v2474
  %2697 = vst [vmem:[%s4 + $0x430] sm:$0xff] %v1948
  %2698 = vst.msk [vmem:[%s4 + $0x438] sm:$0xff] %vm52, %v2476
  %2699 = vst [vmem:[%s4 + $0x440] sm:$0xff] %v1951
  %2700 = vst.msk [vmem:[%s4 + $0x448] sm:$0xff] %vm52, %v2479
  %2701 = vst [vmem:[%s4 + $0x450] sm:$0xff] %v1953
  %2702 = vst.msk [vmem:[%s4 + $0x458] sm:$0xff] %vm52, %v2481
  %2703 = vst [vmem:[%s4 + $0x460] sm:$0xff] %v1956
  %2704 = vst.msk [vmem:[%s4 + $0x468] sm:$0xff] %vm52, %v2484
  %2705 = vst [vmem:[%s4 + $0x470] sm:$0xff] %v1958
  %2706 = vst.msk [vmem:[%s4 + $0x478] sm:$0xff] %vm52, %v2486
  %2707 = vst [vmem:[%s4 + $0x480] sm:$0xff] %v1961
  %2708 = vst.msk [vmem:[%s4 + $0x488] sm:$0xff] %vm52, %v2489
  %2709 = vst [vmem:[%s4 + $0x490] sm:$0xff] %v1963
  %2710 = vst.msk [vmem:[%s4 + $0x498] sm:$0xff] %vm52, %v2491
  %2711 = vst [vmem:[%s4 + $0x4a0] sm:$0xff] %v1966
  %2712 = vst.msk [vmem:[%s4 + $0x4a8] sm:$0xff] %vm52, %v2494
  %2713 = vst [vmem:[%s4 + $0x4b0] sm:$0xff] %v1968
  %2714 = vst.msk [vmem:[%s4 + $0x4b8] sm:$0xff] %vm52, %v2496
  %2715 = vst [vmem:[%s4 + $0x4c0] sm:$0xff] %v1971
  %2716 = vst.msk [vmem:[%s4 + $0x4c8] sm:$0xff] %vm52, %v2499
  %2717 = vst [vmem:[%s4 + $0x4d0] sm:$0xff] %v1973
  %2718 = vst.msk [vmem:[%s4 + $0x4d8] sm:$0xff] %vm52, %v2501
  %2719 = vst [vmem:[%s4 + $0x4e0] sm:$0xff] %v1976
  %2720 = vst.msk [vmem:[%s4 + $0x4e8] sm:$0xff] %vm52, %v2504
  %2721 = vst [vmem:[%s4 + $0x4f0] sm:$0xff] %v1978
  %2722 = vst.msk [vmem:[%s4 + $0x4f8] sm:$0xff] %vm52, %v2506
  %2723 = vst [vmem:[%s4 + $0x500] sm:$0xff] %v1981
  %2724 = vst.msk [vmem:[%s4 + $0x508] sm:$0xff] %vm52, %v2509
  %2725 = vst [vmem:[%s4 + $0x510] sm:$0xff] %v1983
  %2726 = vst.msk [vmem:[%s4 + $0x518] sm:$0xff] %vm52, %v2511
  %2727 = vst [vmem:[%s4 + $0x520] sm:$0xff] %v1986
  %2728 = vst.msk [vmem:[%s4 + $0x528] sm:$0xff] %vm52, %v2514
  %2729 = vst [vmem:[%s4 + $0x530] sm:$0xff] %v1988
  %2730 = vst.msk [vmem:[%s4 + $0x538] sm:$0xff] %vm52, %v2516
  %2731 = vst [vmem:[%s4 + $0x540] sm:$0xff] %v1991
  %2732 = vst.msk [vmem:[%s4 + $0x548] sm:$0xff] %vm52, %v2519
  %2733 = vst [vmem:[%s4 + $0x550] sm:$0xff] %v1993
  %2734 = vst.msk [vmem:[%s4 + $0x558] sm:$0xff] %vm52, %v2521
  %2735 = vst [vmem:[%s4 + $0x560] sm:$0xff] %v1996
  %2736 = vst.msk [vmem:[%s4 + $0x568] sm:$0xff] %vm52, %v2524
  %2737 = vst [vmem:[%s4 + $0x570] sm:$0xff] %v1998
  %2738 = vst.msk [vmem:[%s4 + $0x578] sm:$0xff] %vm52, %v2526
  %2739 = vst [vmem:[%s4 + $0x580] sm:$0xff] %v2001
  %2740 = vst.msk [vmem:[%s4 + $0x588] sm:$0xff] %vm52, %v2529
  %2741 = vst [vmem:[%s4 + $0x590] sm:$0xff] %v2003
  %2742 = vst.msk [vmem:[%s4 + $0x598] sm:$0xff] %vm52, %v2531
  %2743 = vst [vmem:[%s4 + $0x5a0] sm:$0xff] %v2006
  %2744 = vst.msk [vmem:[%s4 + $0x5a8] sm:$0xff] %vm52, %v2534
  %2745 = vst [vmem:[%s4 + $0x5b0] sm:$0xff] %v2008
  %2746 = vst.msk [vmem:[%s4 + $0x5b8] sm:$0xff] %vm52, %v2536
  %2747 = vst [vmem:[%s4 + $0x5c0] sm:$0xff] %v2011
  %2748 = vst.msk [vmem:[%s4 + $0x5c8] sm:$0xff] %vm52, %v2539
  %2749 = vst [vmem:[%s4 + $0x5d0] sm:$0xff] %v2013
  %2750 = vst.msk [vmem:[%s4 + $0x5d8] sm:$0xff] %vm52, %v2541
  %2751 = vst [vmem:[%s4 + $0x5e0] sm:$0xff] %v2016
  %2752 = vst.msk [vmem:[%s4 + $0x5e8] sm:$0xff] %vm52, %v2544
  %2753 = vst [vmem:[%s4 + $0x5f0] sm:$0xff] %v2018
  %2754 = vst.msk [vmem:[%s4 + $0x5f8] sm:$0xff] %vm52, %v2546
  %2755 = vst [vmem:[%s4 + $0x600] sm:$0xff] %v2021
  %2756 = vst.msk [vmem:[%s4 + $0x608] sm:$0xff] %vm52, %v2549
  %2757 = vst [vmem:[%s4 + $0x610] sm:$0xff] %v2023
  %2758 = vst.msk [vmem:[%s4 + $0x618] sm:$0xff] %vm52, %v2551
  %2759 = vst [vmem:[%s4 + $0x620] sm:$0xff] %v2026
  %2760 = vst.msk [vmem:[%s4 + $0x628] sm:$0xff] %vm52, %v2554
  %2761 = vst [vmem:[%s4 + $0x630] sm:$0xff] %v2028
  %2762 = vst.msk [vmem:[%s4 + $0x638] sm:$0xff] %vm52, %v2556
  %2763 = vst [vmem:[%s4 + $0x640] sm:$0xff] %v2031
  %2764 = vst.msk [vmem:[%s4 + $0x648] sm:$0xff] %vm52, %v2559
  %2765 = vst [vmem:[%s4 + $0x650] sm:$0xff] %v2033
  %2766 = vst.msk [vmem:[%s4 + $0x658] sm:$0xff] %vm52, %v2561
  // Predicated region
  $region18: #{bn_conv1x1.1} parent=0 // pred_check
    _
  $region19: #{bn_conv1x1.1} parent=0 // pred_check_branch
    %2768 = sbr.rel (0) target = $region21
  $region20: #{bn_conv1x1.1} parent=0 // pred_region
    _
  $region21: #{bn_conv1x1.1} parent=0 // pred_fallthru
    _
  // Predicated region
  $region22: #{bn_conv1x1.1} parent=0 // pred_check
    _
  $region23: #{bn_conv1x1.1} parent=0 // pred_check_branch
    %2770 = sbr.rel (0) target = $region25
  $region24: #{bn_conv1x1.1} parent=0 // pred_region
    _
  $region25: #{bn_conv1x1.1} parent=0 // pred_fallthru
    _

</llo_original>
